<compile_context>
chip_gen: v6e
topology: v6e:2x2x1
jax: 0.10.0
libtpu: 0.0.40
codegen_flags: <defaults>
</compile_context>

<pallas_src>
import functools

import jax
import jax.numpy as jnp
from jax import lax
from jax.experimental import pallas as pl
from jax.experimental.pallas import tpu as pltpu


def _round_up(x, m):
    return (x + m - 1) // m * m


def _pick_row_tile(H, max_rows):
    """Largest divisor of H <= max_rows; pad H if only pathological divisors exist."""
    max_rows = max(1, min(H, max_rows))
    best = 1
    for t in range(max_rows, 0, -1):
        if H % t == 0:
            best = t
            break
    ideal_steps = -(-H // max_rows)
    if H // best <= 2 * ideal_steps:          # divisor is "good enough"
        return best, H
    return max_rows, _round_up(H, max_rows)   # pad H instead of tiny tiles


def _dwconv_compute(xm_ref, w_ref, b_ref, col_ref, o_ref, ext_ref, top, bot, wp):
    """Shared 3x3 depthwise body.

    xm_ref : (1, N, TC)   flattened (TH rows x Wp cols) input tile
    w_ref  : (9, TC)      taps, tap index = kh*3 + kw
    b_ref  : (1, TC)      bias
    col_ref: (N, 1) i32   column index within each row (precomputed, constant per call)
    o_ref  : (1, N, TC)
    ext_ref: ((TH+2)*Wp, TC) VMEM scratch, input dtype
    top/bot: (Wp, TC)     halo rows (already zeroed at the image border)
    """
    f32 = jnp.float32
    n = o_ref.shape[1]

    # Build the row-extended tile in the scratch (input dtype -> cheap for bf16).
    ext_ref[pl.ds(0, wp)] = top
    ext_ref[pl.ds(wp, n)] = xm_ref[0]
    ext_ref[pl.ds(wp + n, wp)] = bot

    w_all = w_ref[...].astype(f32)                 # (9, TC), read once
    r0 = ext_ref[pl.ds(0, n)].astype(f32)          # row above each output row
    r1 = xm_ref[0].astype(f32)                     # center row
    r2 = ext_ref[pl.ds(2 * wp, n)].astype(f32)     # row below each output row

    # Vertical column-partials (plain FMAs, no shifts yet).
    p_c = r0 * w_all[1] + r1 * w_all[4] + r2 * w_all[7]   # kw = 1 (center column)
    p_l = r0 * w_all[0] + r1 * w_all[3] + r2 * w_all[6]   # kw = 0 (left column)
    p_r = r0 * w_all[2] + r1 * w_all[5] + r2 * w_all[8]   # kw = 2 (right column)

    # One width shift per side on the partials (sublane rotate on the flattened rows);
    # the row-boundary wrap-around is exactly the masked column, so a single where each.
    col = col_ref[...]                                     # (n, 1) int32
    p_l = jnp.where(col == 0, 0.0, pltpu.roll(p_l, 1, 0))          # value taken from w-1
    p_r = jnp.where(col == wp - 1, 0.0, pltpu.roll(p_r, n - 1, 0))  # value taken from w+1

    acc = p_c + p_l + p_r + b_ref[0].astype(f32)           # bias added once at the end
    o_ref[0] = acc.astype(o_ref.dtype)


def _dwconv_kernel_halo(xm_ref, xt_ref, xb_ref, w_ref, b_ref, col_ref, o_ref,
                        ext_ref, *, wp):
    h = pl.program_id(2)
    nh = pl.num_programs(2)
    zrow = jnp.zeros(xt_ref.shape[1:], dtype=xt_ref.dtype)        # (wp, TC)
    top = jnp.where(h > 0, xt_ref[0], zrow)        # select (not multiply): Inf/NaN safe
    bot = jnp.where(h < nh - 1, xb_ref[0], zrow)
    _dwconv_compute(xm_ref, w_ref, b_ref, col_ref, o_ref, ext_ref, top, bot, wp)


def _dwconv_kernel_nohalo(xm_ref, w_ref, b_ref, col_ref, o_ref, ext_ref, *, wp):
    zrow = jnp.zeros((wp, xm_ref.shape[2]), dtype=xm_ref.dtype)
    _dwconv_compute(xm_ref, w_ref, b_ref, col_ref, o_ref, ext_ref, zrow, zrow, wp)


def dwconv(x, weight, bias, *, row_tile=None, channel_tile=None):
    """Depthwise 3x3 conv, stride 1, pad 1, groups=C, with bias, NHWC.

    x:      (B, H, W, C)
    weight: (3, 3, C)   (PyTorch Conv2d weight (C,1,3,3) transposed to (3,3,C))
    bias:   (C,)
    returns (B, H, W, C)
    """
    B, H, W, C = x.shape
    dt = x.dtype
    itemsize = x.dtype.itemsize

    # --- channels: pad to a multiple of 128 for lane-dense stores; tile 128..512 ---
    Cp = _round_up(C, 128)
    if channel_tile is None:
        channel_tile = next(t for t in (512, 384, 256, 128) if Cp % t == 0)
    TC = int(channel_tile)
    assert Cp % TC == 0 and TC % 128 == 0
    n_ct = Cp // TC

    # --- width: pad to a multiple of 8 so flattened rows stay sublane-aligned ---
    Wp = _round_up(W, 8)

    # --- rows: budget from the true VMEM footprint (in/out double-buffered blocks,
    # ext scratch, ~4 tile-sized f32 intermediates); mid block target ~2 MiB f32 ---
    if row_tile is None:
        per_row = Wp * TC * (5 * itemsize + 4 * 4)
        max_rows = max(1, min((2 << 20) // (Wp * TC * 4), (20 << 20) // per_row))
        TH, Hp = _pick_row_tile(H, max_rows)
        # v7x megacore: keep >= 2 grid steps when the grid would be degenerate.
        if B == 1 and n_ct == 1 and Hp // TH <= 1 and H >= 2:
            TH = (H + 1) // 2
            Hp = _round_up(H, TH)
    else:
        TH = int(row_tile)
        Hp = _round_up(H, TH)
    n_ht = Hp // TH
    N = TH * Wp

    # --- wrapper-side zero padding (exact: conv uses zero padding anyway) ---
    need_pad = (Hp != H) or (Wp != W) or (Cp != C)
    xp = jnp.pad(x, ((0, 0), (0, Hp - H), (0, Wp - W), (0, Cp - C))) if need_pad else x
    x_flat = xp.reshape(B, Hp * Wp, Cp)

    w_padded = weight if Cp == C else jnp.pad(weight, ((0, 0), (0, 0), (0, Cp - C)))
    w_flat = w_padded.reshape(9, Cp)
    b_padded = bias if Cp == C else jnp.pad(bias, (0, Cp - C))
    b2 = b_padded.reshape(1, Cp)

    # Column-index pattern within a tile (same for every tile): avoids in-kernel mod/iota.
    col_ids = jnp.tile(jnp.arange(Wp, dtype=jnp.int32), TH).reshape(N, 1)

    mid_spec = pl.BlockSpec((1, N, TC), lambda b, c, h: (b, h, c))
    w_spec = pl.BlockSpec((9, TC), lambda b, c, h: (0, c))
    b_spec = pl.BlockSpec((1, TC), lambda b, c, h: (0, c))
    col_spec = pl.BlockSpec((N, 1), lambda b, c, h: (0, 0))
    o_spec = pl.BlockSpec((1, N, TC), lambda b, c, h: (b, h, c))

    if n_ht > 1:
        # 1-row halo blocks; row index clamped at the border (kernel zeroes them there).
        top_spec = pl.BlockSpec(
            (1, Wp, TC), lambda b, c, h: (b, jnp.maximum(h * TH - 1, 0), c))
        bot_spec = pl.BlockSpec(
            (1, Wp, TC), lambda b, c, h: (b, jnp.minimum(h * TH + TH, Hp - 1), c))
        in_specs = [mid_spec, top_spec, bot_spec, w_spec, b_spec, col_spec]
        kernel = functools.partial(_dwconv_kernel_halo, wp=Wp)
        args = (x_flat, x_flat, x_flat, w_flat, b2, col_ids)
    else:
        # Single H tile: skip the halo DMAs entirely.
        in_specs = [mid_spec, w_spec, b_spec, col_spec]
        kernel = functools.partial(_dwconv_kernel_nohalo, wp=Wp)
        args = (x_flat, w_flat, b2, col_ids)

    cost = pl.CostEstimate(
        flops=18 * B * Hp * Wp * Cp,
        transcendentals=0,
        bytes_accessed=2 * B * Hp * Wp * Cp * itemsize,
    )

    out_flat = pl.pallas_call(
        kernel,
        out_shape=jax.ShapeDtypeStruct((B, Hp * Wp, Cp), dt),
        grid_spec=pltpu.PrefetchScalarGridSpec(
            num_scalar_prefetch=0,
            grid=(B, n_ct, n_ht),
            in_specs=in_specs,
            out_specs=o_spec,
            scratch_shapes=[pltpu.VMEM(((TH + 2) * Wp, TC), dt)],
        ),
        compiler_params=pltpu.CompilerParams(
            dimension_semantics=("parallel", "parallel", "parallel"),
            vmem_limit_bytes=32 * 1024 * 1024,
        ),
        cost_estimate=cost,
    )(*args)

    out = out_flat.reshape(B, Hp, Wp, Cp)
    if need_pad:
        out = out[:, :H, :W, :C]
    return out


def dwconv_reference(x, weight, bias):
    # Pure-JAX reference: grouped conv in NHWC, HWIO kernel (3,3,1,C).
    C = x.shape[-1]
    k = weight.reshape(3, 3, 1, C)
    y = lax.conv_general_dilated(
        x, k, window_strides=(1, 1), padding=((1, 1), (1, 1)),
        dimension_numbers=("NHWC", "HWIO", "NHWC"),
        feature_group_count=C)
    return y + bias


if __name__ == "__main__":
    key = jax.random.PRNGKey(0)
    kx, kw, kb = jax.random.split(key, 3)

    # DWConv(dim=C) forward; x is NHWC.  C=128 keeps the lane dimension dense.
    B, H, W, C = 2, 16, 16, 128
    x = jax.random.normal(kx, (B, H, W, C), dtype=jnp.float32)
    # PyTorch Conv2d weight would be (C, 1, 3, 3); stored here as (3, 3, C).
    weight = jax.random.normal(kw, (3, 3, C), dtype=jnp.float32) * 0.1
    bias = jax.random.normal(kb, (C,), dtype=jnp.float32) * 0.1

    # 1) aligned shapes, explicit row tiling -> exercises the halo path.
    out = jax.block_until_ready(dwconv(x, weight, bias, row_tile=8))
    ref = dwconv_reference(x, weight, bias)
    assert out.shape == (B, H, W, C)
    assert jnp.allclose(out, ref, atol=1e-4, rtol=1e-4), "mismatch (f32, halo)"

    # 2) unaligned shapes (C=32 -> padded to 128 lanes, W=7 -> padded to 8), no-halo path.
    B2, H2, W2, C2 = 2, 10, 7, 32
    x2 = jax.random.normal(kx, (B2, H2, W2, C2), dtype=jnp.float32)
    w2 = jax.random.normal(kw, (3, 3, C2), dtype=jnp.float32) * 0.1
    b2 = jax.random.normal(kb, (C2,), dtype=jnp.float32) * 0.1
    out2 = jax.block_until_ready(dwconv(x2, w2, b2))
    ref2 = dwconv_reference(x2, w2, b2)
    assert jnp.allclose(out2, ref2, atol=1e-4, rtol=1e-4), "mismatch (f32, padded, no-halo)"

    # 3) same unaligned shapes with row tiling -> padded + halo path.
    out3 = jax.block_until_ready(dwconv(x2, w2, b2, row_tile=5))
    assert jnp.allclose(out3, ref2, atol=1e-4, rtol=1e-4), "mismatch (f32, padded, halo)"

    # 4) bf16 I/O (accumulation stays f32 in-kernel) -> halves HBM bytes.
    xb = x.astype(jnp.bfloat16)
    wb = weight.astype(jnp.bfloat16)
    bb = bias.astype(jnp.bfloat16)
    out4 = jax.block_until_ready(dwconv(xb, wb, bb, row_tile=8))
    ref4 = dwconv_reference(xb.astype(jnp.float32), wb.astype(jnp.float32),
                            bb.astype(jnp.float32))
    assert jnp.allclose(out4.astype(jnp.float32), ref4, atol=0.05, rtol=0.05), \
        "mismatch (bf16)"

    print("KERNEL_OK")
</pallas_src>

<mosaic_0001>
module attributes {stable_mosaic.version = 11 : i64} {
  func.func @_dwconv_kernel_halo(%arg0: i32, %arg1: i32, %arg2: i32, %arg3: memref<1x128x128xf32, #tpu.memory_space<vmem>>, %arg4: memref<1x16x128xf32, #tpu.memory_space<vmem>>, %arg5: memref<1x16x128xf32, #tpu.memory_space<vmem>>, %arg6: memref<9x128xf32, #tpu.memory_space<vmem>>, %arg7: memref<1x128xf32, #tpu.memory_space<vmem>>, %arg8: memref<128x1xi32, #tpu.memory_space<vmem>>, %arg9: memref<1x128x128xf32, #tpu.memory_space<vmem>>, %arg10: memref<160x128xf32, #tpu.memory_space<vmem>>) attributes {dimension_semantics = [#tpu.dimension_semantics<parallel>, #tpu.dimension_semantics<parallel>, #tpu.dimension_semantics<parallel>], iteration_bounds = array<i64: 2, 1, 2>, scalar_prefetch = 0 : i64, scratch_operands = 1 : i64, tpu.core_type = #tpu.core_type<tc>, window_params = [{transform_indices = @transform_0, window_bounds = array<i64: 1, 128, 128>}, {transform_indices = @transform_1, window_bounds = array<i64: 1, 16, 128>}, {transform_indices = @transform_2, window_bounds = array<i64: 1, 16, 128>}, {transform_indices = @transform_3, window_bounds = array<i64: 9, 128>}, {transform_indices = @transform_4, window_bounds = array<i64: 1, 128>}, {pipeline_mode = #tpu.pipeline_mode<synchronous>, transform_indices = @transform_5, window_bounds = array<i64: 128, 1>}, {transform_indices = @transform_6, window_bounds = array<i64: 1, 128, 128>}]} {
    %cst = arith.constant 0.000000e+00 : f32
    %0 = vector.broadcast %cst : f32 to vector<16x128xf32>
    %c0_i32 = arith.constant 0 : i32
    %1 = arith.cmpi sgt, %arg2, %c0_i32 : i32
    %c0 = arith.constant 0 : index
    %c0_0 = arith.constant 0 : index
    %c0_1 = arith.constant 0 : index
    %2 = vector.load %arg4[%c0, %c0_0, %c0_1] : memref<1x16x128xf32, #tpu.memory_space<vmem>>, vector<1x16x128xf32>
    %3 = vector.shape_cast %2 : vector<1x16x128xf32> to vector<16x128xf32>
    %4 = arith.select %1, %3, %0 : vector<16x128xf32>
    %c1_i32 = arith.constant 1 : i32
    %5 = arith.cmpi slt, %arg2, %c1_i32 : i32
    %c0_2 = arith.constant 0 : index
    %c0_3 = arith.constant 0 : index
    %c0_4 = arith.constant 0 : index
    %6 = vector.load %arg5[%c0_2, %c0_3, %c0_4] : memref<1x16x128xf32, #tpu.memory_space<vmem>>, vector<1x16x128xf32>
    %7 = vector.shape_cast %6 : vector<1x16x128xf32> to vector<16x128xf32>
    %8 = arith.select %5, %7, %0 : vector<16x128xf32>
    %c0_5 = arith.constant 0 : index
    %c0_6 = arith.constant 0 : index
    %9 = vector.load %arg10[%c0_5, %c0_6] : memref<160x128xf32, #tpu.memory_space<vmem>>, vector<16x128xf32>
    tpu.vector_store %arg10[%c0_5, %c0_6], %4 {strides = array<i32>} : memref<160x128xf32, #tpu.memory_space<vmem>>, vector<16x128xf32>,
    %c0_7 = arith.constant 0 : index
    %c0_8 = arith.constant 0 : index
    %c0_9 = arith.constant 0 : index
    %10 = vector.load %arg3[%c0_7, %c0_8, %c0_9] : memref<1x128x128xf32, #tpu.memory_space<vmem>>, vector<1x128x128xf32>
    %11 = vector.shape_cast %10 : vector<1x128x128xf32> to vector<128x128xf32>
    %c16 = arith.constant 16 : index
    %c0_10 = arith.constant 0 : index
    %12 = vector.load %arg10[%c16, %c0_10] : memref<160x128xf32, #tpu.memory_space<vmem>>, vector<128x128xf32>
    tpu.vector_store %arg10[%c16, %c0_10], %11 {strides = array<i32>} : memref<160x128xf32, #tpu.memory_space<vmem>>, vector<128x128xf32>,
    %c144 = arith.constant 144 : index
    %c0_11 = arith.constant 0 : index
    %13 = vector.load %arg10[%c144, %c0_11] : memref<160x128xf32, #tpu.memory_space<vmem>>, vector<16x128xf32>
    tpu.vector_store %arg10[%c144, %c0_11], %8 {strides = array<i32>} : memref<160x128xf32, #tpu.memory_space<vmem>>, vector<16x128xf32>,
    %c0_12 = arith.constant 0 : index
    %c0_13 = arith.constant 0 : index
    %14 = vector.load %arg6[%c0_12, %c0_13] : memref<9x128xf32, #tpu.memory_space<vmem>>, vector<9x128xf32>
    %c0_14 = arith.constant 0 : index
    %c0_15 = arith.constant 0 : index
    %15 = vector.load %arg10[%c0_14, %c0_15] : memref<160x128xf32, #tpu.memory_space<vmem>>, vector<128x128xf32>
    %c0_16 = arith.constant 0 : index
    %c0_17 = arith.constant 0 : index
    %c0_18 = arith.constant 0 : index
    %16 = vector.load %arg3[%c0_16, %c0_17, %c0_18] : memref<1x128x128xf32, #tpu.memory_space<vmem>>, vector<1x128x128xf32>
    %17 = vector.shape_cast %16 : vector<1x128x128xf32> to vector<128x128xf32>
    %c32 = arith.constant 32 : index
    %c0_19 = arith.constant 0 : index
    %18 = vector.load %arg10[%c32, %c0_19] : memref<160x128xf32, #tpu.memory_space<vmem>>, vector<128x128xf32>
    %19 = vector.extract_strided_slice %14 {offsets = [1, 0], sizes = [1, 128], strides = [1, 1]} : vector<9x128xf32> to vector<1x128xf32>
    %20 = vector.shape_cast %19 : vector<1x128xf32> to vector<128xf32>
    %21 = vector.shape_cast %20 : vector<128xf32> to vector<1x128xf32>
    %22 = vector.broadcast %21 : vector<1x128xf32> to vector<128x128xf32>
    %23 = arith.mulf %15, %22 : vector<128x128xf32>
    %24 = vector.extract_strided_slice %14 {offsets = [4, 0], sizes = [1, 128], strides = [1, 1]} : vector<9x128xf32> to vector<1x128xf32>
    %25 = vector.shape_cast %24 : vector<1x128xf32> to vector<128xf32>
    %26 = vector.shape_cast %25 : vector<128xf32> to vector<1x128xf32>
    %27 = vector.broadcast %26 : vector<1x128xf32> to vector<128x128xf32>
    %28 = arith.mulf %17, %27 : vector<128x128xf32>
    %29 = arith.addf %23, %28 : vector<128x128xf32>
    %30 = vector.extract_strided_slice %14 {offsets = [7, 0], sizes = [1, 128], strides = [1, 1]} : vector<9x128xf32> to vector<1x128xf32>
    %31 = vector.shape_cast %30 : vector<1x128xf32> to vector<128xf32>
    %32 = vector.shape_cast %31 : vector<128xf32> to vector<1x128xf32>
    %33 = vector.broadcast %32 : vector<1x128xf32> to vector<128x128xf32>
    %34 = arith.mulf %18, %33 : vector<128x128xf32>
    %35 = arith.addf %29, %34 : vector<128x128xf32>
    %36 = vector.extract_strided_slice %14 {offsets = [0, 0], sizes = [1, 128], strides = [1, 1]} : vector<9x128xf32> to vector<1x128xf32>
    %37 = vector.shape_cast %36 : vector<1x128xf32> to vector<128xf32>
    %38 = vector.shape_cast %37 : vector<128xf32> to vector<1x128xf32>
    %39 = vector.broadcast %38 : vector<1x128xf32> to vector<128x128xf32>
    %40 = arith.mulf %15, %39 : vector<128x128xf32>
    %41 = vector.extract_strided_slice %14 {offsets = [3, 0], sizes = [1, 128], strides = [1, 1]} : vector<9x128xf32> to vector<1x128xf32>
    %42 = vector.shape_cast %41 : vector<1x128xf32> to vector<128xf32>
    %43 = vector.shape_cast %42 : vector<128xf32> to vector<1x128xf32>
    %44 = vector.broadcast %43 : vector<1x128xf32> to vector<128x128xf32>
    %45 = arith.mulf %17, %44 : vector<128x128xf32>
    %46 = arith.addf %40, %45 : vector<128x128xf32>
    %47 = vector.extract_strided_slice %14 {offsets = [6, 0], sizes = [1, 128], strides = [1, 1]} : vector<9x128xf32> to vector<1x128xf32>
    %48 = vector.shape_cast %47 : vector<1x128xf32> to vector<128xf32>
    %49 = vector.shape_cast %48 : vector<128xf32> to vector<1x128xf32>
    %50 = vector.broadcast %49 : vector<1x128xf32> to vector<128x128xf32>
    %51 = arith.mulf %18, %50 : vector<128x128xf32>
    %52 = arith.addf %46, %51 : vector<128x128xf32>
    %53 = vector.extract_strided_slice %14 {offsets = [2, 0], sizes = [1, 128], strides = [1, 1]} : vector<9x128xf32> to vector<1x128xf32>
    %54 = vector.shape_cast %53 : vector<1x128xf32> to vector<128xf32>
    %55 = vector.shape_cast %54 : vector<128xf32> to vector<1x128xf32>
    %56 = vector.broadcast %55 : vector<1x128xf32> to vector<128x128xf32>
    %57 = arith.mulf %15, %56 : vector<128x128xf32>
    %58 = vector.extract_strided_slice %14 {offsets = [5, 0], sizes = [1, 128], strides = [1, 1]} : vector<9x128xf32> to vector<1x128xf32>
    %59 = vector.shape_cast %58 : vector<1x128xf32> to vector<128xf32>
    %60 = vector.shape_cast %59 : vector<128xf32> to vector<1x128xf32>
    %61 = vector.broadcast %60 : vector<1x128xf32> to vector<128x128xf32>
    %62 = arith.mulf %17, %61 : vector<128x128xf32>
    %63 = arith.addf %57, %62 : vector<128x128xf32>
    %64 = vector.extract_strided_slice %14 {offsets = [8, 0], sizes = [1, 128], strides = [1, 1]} : vector<9x128xf32> to vector<1x128xf32>
    %65 = vector.shape_cast %64 : vector<1x128xf32> to vector<128xf32>
    %66 = vector.shape_cast %65 : vector<128xf32> to vector<1x128xf32>
    %67 = vector.broadcast %66 : vector<1x128xf32> to vector<128x128xf32>
    %68 = arith.mulf %18, %67 : vector<128x128xf32>
    %69 = arith.addf %63, %68 : vector<128x128xf32>
    %c0_20 = arith.constant 0 : index
    %c0_21 = arith.constant 0 : index
    %70 = vector.load %arg8[%c0_20, %c0_21] : memref<128x1xi32, #tpu.memory_space<vmem>>, vector<128x1xi32>
    %c0_i32_22 = arith.constant 0 : i32
    %71 = vector.broadcast %c0_i32_22 : i32 to vector<128x1xi32>
    %72 = arith.cmpi eq, %70, %71 : vector<128x1xi32>
    %c1_i32_23 = arith.constant 1 : i32
    %73 = tpu.dynamic_rotate %52 by %c1_i32_23 dim 0 : vector<128x128xf32>, i32 -> vector<128x128xf32>
    %cst_24 = arith.constant 0.000000e+00 : f32
    %74 = vector.shape_cast %72 : vector<128x1xi1> to vector<128x1xi1>
    %75 = vector.broadcast %74 : vector<128x1xi1> to vector<128x128xi1>
    %76 = vector.broadcast %cst_24 : f32 to vector<128x128xf32>
    %77 = arith.select %75, %76, %73 : vector<128x128xi1>, vector<128x128xf32>
    %c15_i32 = arith.constant 15 : i32
    %78 = vector.broadcast %c15_i32 : i32 to vector<128x1xi32>
    %79 = arith.cmpi eq, %70, %78 : vector<128x1xi32>
    %c127_i32 = arith.constant 127 : i32
    %80 = tpu.dynamic_rotate %69 by %c127_i32 dim 0 : vector<128x128xf32>, i32 -> vector<128x128xf32>
    %cst_25 = arith.constant 0.000000e+00 : f32
    %81 = vector.shape_cast %79 : vector<128x1xi1> to vector<128x1xi1>
    %82 = vector.broadcast %81 : vector<128x1xi1> to vector<128x128xi1>
    %83 = vector.broadcast %cst_25 : f32 to vector<128x128xf32>
    %84 = arith.select %82, %83, %80 : vector<128x128xi1>, vector<128x128xf32>
    %85 = arith.addf %35, %77 : vector<128x128xf32>
    %86 = arith.addf %85, %84 : vector<128x128xf32>
    %c0_26 = arith.constant 0 : index
    %c0_27 = arith.constant 0 : index
    %87 = vector.load %arg7[%c0_26, %c0_27] : memref<1x128xf32, #tpu.memory_space<vmem>>, vector<1x128xf32>
    %88 = vector.shape_cast %87 : vector<1x128xf32> to vector<128xf32>
    %89 = vector.shape_cast %88 : vector<128xf32> to vector<1x128xf32>
    %90 = vector.broadcast %89 : vector<1x128xf32> to vector<128x128xf32>
    %91 = arith.addf %86, %90 : vector<128x128xf32>
    %c0_28 = arith.constant 0 : index
    %c0_29 = arith.constant 0 : index
    %c0_30 = arith.constant 0 : index
    %92 = vector.load %arg9[%c0_28, %c0_29, %c0_30] : memref<1x128x128xf32, #tpu.memory_space<vmem>>, vector<1x128x128xf32>
    %93 = vector.shape_cast %92 : vector<1x128x128xf32> to vector<128x128xf32>
    %94 = vector.shape_cast %91 : vector<128x128xf32> to vector<1x128x128xf32>
    tpu.vector_store %arg9[%c0_28, %c0_29, %c0_30], %94 {strides = array<i32>} : memref<1x128x128xf32, #tpu.memory_space<vmem>>, vector<1x128x128xf32>,
    return
  }
  func.func @transform_0(%arg0: i32, %arg1: i32, %arg2: i32) -> (i32, i32, i32) {
    %c0_i32 = arith.constant 0 : i32
    return %arg0, %arg2, %arg1 : i32, i32, i32
  }
  func.func @transform_1(%arg0: i32, %arg1: i32, %arg2: i32) -> (i32, i32, i32) {
    %c8_i32 = arith.constant 8 : i32
    %0 = arith.muli %arg2, %c8_i32 : i32
    %c1_i32 = arith.constant 1 : i32
    %1 = arith.subi %0, %c1_i32 : i32
    %c0_i32 = arith.constant 0 : i32
    %2 = arith.maxsi %1, %c0_i32 : i32
    %c0_i32_0 = arith.constant 0 : i32
    return %arg0, %2, %arg1 : i32, i32, i32
  }
  func.func @transform_2(%arg0: i32, %arg1: i32, %arg2: i32) -> (i32, i32, i32) {
    %c8_i32 = arith.constant 8 : i32
    %0 = arith.muli %arg2, %c8_i32 : i32
    %c8_i32_0 = arith.constant 8 : i32
    %1 = arith.addi %0, %c8_i32_0 : i32
    %c15_i32 = arith.constant 15 : i32
    %2 = arith.minsi %1, %c15_i32 : i32
    %c0_i32 = arith.constant 0 : i32
    return %arg0, %2, %arg1 : i32, i32, i32
  }
  func.func @transform_3(%arg0: i32, %arg1: i32, %arg2: i32) -> (i32, i32) {
    %c0_i32 = arith.constant 0 : i32
    %c0_i32_0 = arith.constant 0 : i32
    return %c0_i32, %arg1 : i32, i32
  }
  func.func @transform_4(%arg0: i32, %arg1: i32, %arg2: i32) -> (i32, i32) {
    %c0_i32 = arith.constant 0 : i32
    %c0_i32_0 = arith.constant 0 : i32
    return %c0_i32, %arg1 : i32, i32
  }
  func.func @transform_5(%arg0: i32, %arg1: i32, %arg2: i32) -> (i32, i32) {
    %c0_i32 = arith.constant 0 : i32
    %c0_i32_0 = arith.constant 0 : i32
    %c0_i32_1 = arith.constant 0 : i32
    return %c0_i32, %c0_i32_0 : i32, i32
  }
  func.func @transform_6(%arg0: i32, %arg1: i32, %arg2: i32) -> (i32, i32, i32) {
    %c0_i32 = arith.constant 0 : i32
    return %arg0, %arg2, %arg1 : i32, i32, i32
  }
}

</mosaic_0001>

<llo_original>
// kernel: tpu_custom_call.1
$region0: #{tpu_custom_call.1}
  #allocation0 [shape = 'u32[]', space=smem, size = 0x4, offset = 0x4, fixed_abs, tag = 'smem constant byte address 0x4 - core index']
  #allocation1 [shape = 'u32[144,128]{1,0:T(1,128)}', space=vmem, size = 0x12000, scoped, tag = 'internal scratch']
  #allocation2 [shape = 'f32[160,128]{1,0:T(8,128)}', space=vmem, size = 0x14000, scoped, tag = 'scratch operand']
  %s0 = inlined_call_operand.hbm [shape: f32[2,256,128], index: 0, kind: input, shape index: {}]
  %s1 = inlined_call_operand.hbm [shape: f32[2,256,128], index: 1, kind: input, shape index: {}]
  %s2 = inlined_call_operand.hbm [shape: f32[2,256,128], index: 2, kind: input, shape index: {}]
  %s3 = inlined_call_operand.vmem [shape: f32[9,128], index: 3, kind: input, shape index: {}]
  %s4 = inlined_call_operand.vmem [shape: f32[1,128], index: 4, kind: input, shape index: {}]
  %s5 = inlined_call_operand.vmem [shape: s32[128,1], index: 5, kind: input, shape index: {}]
  %s6 = inlined_call_operand.hbm [shape: f32[2,256,128], index: 6, kind: output, shape index: {}]
  %s7 = sld [smem:[#allocation0]]
  $region69: #{tpu_custom_call.1} parent=0
    _
  %s9 = ssub.s32 1, %s7
  %s10 = scalar_select 0, %s9, %s7
  $region1: #{tpu_custom_call.1} parent=0
    #allocation3 [shape = 'u8[131072]{0}', space=vmem, size = 0x20000, scoped, tag = 'input window, operand 0']
    #allocation4 [shape = 's32[2]{0}', space=sflag, size = 0x8, scoped, tag = 'scoped memory for tpu_custom_call.1']
    #allocation5 [shape = 's32[2]{0}', space=sflag, size = 0x8, scoped, tag = 'scoped memory for tpu_custom_call.1']
    #allocation6 [shape = 'u8[16384]{0}', space=vmem, size = 0x4000, scoped, tag = 'input window, operand 1']
    #allocation7 [shape = 's32[2]{0}', space=sflag, size = 0x8, scoped, tag = 'scoped memory for tpu_custom_call.1']
    #allocation8 [shape = 'u8[16384]{0}', space=vmem, size = 0x4000, scoped, tag = 'input window, operand 2']
    #allocation9 [shape = 'u8[131072]{0}', space=vmem, size = 0x20000, scoped, tag = 'output window, operand 0']
    %11 = vsyncpa [#allocation4], 0
    %s12 = scalar_lea.sflag [#allocation4], 1
    %13 = vsyncpa %s12, 0
    %14 = vsyncpa [#allocation7], 0
    %s15 = scalar_lea.sflag [#allocation7], 1
    %16 = vsyncpa %s15, 0
    %17 = vsyncpa [#allocation5], 0
    %s18 = scalar_lea.sflag [#allocation5], 1
    %19 = vsyncpa %s18, 0
    loop: start=0, step=1, limit=6
    $region2: #{tpu_custom_call.1} parent=1 // loop_pre_header
      _
    $region3: #{tpu_custom_call.1} parent=1 // loop_header
      %s21 = sphi 0, %s25
      %p22 = scmp.ge.s32.totalorder %s21, 6
      %s28 = sphi 0, %s47
      %s29 = sphi 0, %s43
      %s30 = sphi 0, %s39
      %s31 = sphi 0, %s28
      %s32 = sphi 0, %s29
      %s33 = sphi 0, %s30
      %s34 = sphi 0, %s31
      %s35 = sphi 0, %s32
      %s36 = sphi 0, %s33
      %s54 = sphi 0, %s56
      %s57 = sphi 0, %s54
      %s58 = sphi 0, %s57
      %s74 = sphi 0, %s58
      %s92 = sphi 0, %s94
      %s95 = sphi 0, %s92
      %s96 = sphi 0, %s95
      %s112 = sphi 0, %s96
      %s130 = sphi 0, %s132
      %s133 = sphi 0, %s130
      %s134 = sphi 0, %s133
      %s150 = sphi 0, %s134
      %s156 = sphi 0, %s158
      %s159 = sphi 0, %s156
      %s160 = sphi 0, %s159
      %s176 = sphi 0, %s160
      %s182 = sphi 0, %s184
      %s185 = sphi 0, %s182
      %s186 = sphi 0, %s185
      %s202 = sphi 0, %s186
      %s206 = sphi 0, %s206
      %s208 = sphi 0, %s206
      %s209 = sphi 0, %s208
      %s223 = sphi 0, %s209
      %s233 = sphi 0, %s235
      %s236 = sphi 0, %s233
      %s237 = sphi 0, %s236
      %s253 = sphi 0, %s237
    $region4: #{tpu_custom_call.1} parent=1 // loop_header_branch
      %24 = sbr.rel (%p22) target = $region8
    $region5: #{tpu_custom_call.1} parent=1 // loop_body
      %s26 = ssub.s32 %s21, 1
      %s27 = ssub.s32 %s21, 2
      %s37 = sadd.s32 1, %s30
      %p38 = scmp.ge.s32.totalorder %s37, 2
      %s39 = scalar_select %p38, 0, %s37
      %s40 = sadd.s32 1, %s29
      %s41 = scalar_select %p38, %s40, %s29
      %p42 = scmp.ge.s32.totalorder %s41, 1
      %s43 = scalar_select %p42, 0, %s41
      %s44 = sadd.s32 1, %s28
      %s45 = scalar_select %p42, %s44, %s28
      %p46 = scmp.ge.s32.totalorder %s45, 2
      %s47 = scalar_select %p46, 0, %s45
      %s48 = ssub.s32 %s28, %s47
      %s49 = ssub.s32 %s30, %s39
      %s50 = sor.u32 %s48, %s49
      %s51 = ssub.s32 %s29, %s43
      %s52 = sor.u32 %s50, %s51
      %p53 = scmp.eq.s32.totalorder %s52, 0
      %s55 = sadd.s32 %s54, 1
      %s56 = scalar_select %p53, %s54, %s55
      %p59 = pneg %p53
      %p60 = scmp.eq.s32.totalorder %s21, 3
      %p61 = por %p59, %p60
      %p62 = scmp.ne.s32.totalorder %s54, %s57
      %p63 = scmp.eq.s32.totalorder %s21, 0
      %p64 = por %p62, %p63
      %p65 = scmp.ne.s32.totalorder %s54, %s57
      %p66 = scmp.eq.s32.totalorder %s26, 3
      %p67 = por %p65, %p66
      %p68 = scmp.ne.s32.totalorder %s57, %s58
      %p69 = scmp.eq.s32.totalorder %s26, 0
      %p70 = por %p68, %p69
      %p71 = scmp.ne.s32.totalorder %s57, %s58
      %p72 = scmp.eq.s32.totalorder %s27, 3
      %p73 = por %p71, %p72
      %p75 = scmp.ne.s32.totalorder %s58, %s74
      %p76 = scmp.eq.s32.totalorder %s27, 0
      %p77 = por %p75, %p76
      %s78 = smul.u32 %s30, 8
      %s79 = ssub.s32 %s78, 1
      %p80 = scmp.gt.s32.totalorder %s79, 0
      %s81 = scalar_select %p80, %s79, 0
      %s82 = smul.u32 %s39, 8
      %s83 = ssub.s32 %s82, 1
      %p84 = scmp.gt.s32.totalorder %s83, 0
      %s85 = scalar_select %p84, %s83, 0
      %s86 = ssub.s32 %s28, %s47
      %s87 = ssub.s32 %s81, %s85
      %s88 = sor.u32 %s86, %s87
      %s89 = ssub.s32 %s29, %s43
      %s90 = sor.u32 %s88, %s89
      %p91 = scmp.eq.s32.totalorder %s90, 0
      %s93 = sadd.s32 %s92, 1
      %s94 = scalar_select %p91, %s92, %s93
      %p97 = pneg %p91
      %p98 = scmp.eq.s32.totalorder %s21, 3
      %p99 = por %p97, %p98
      %p100 = scmp.ne.s32.totalorder %s92, %s95
      %p101 = scmp.eq.s32.totalorder %s21, 0
      %p102 = por %p100, %p101
      %p103 = scmp.ne.s32.totalorder %s92, %s95
      %p104 = scmp.eq.s32.totalorder %s26, 3
      %p105 = por %p103, %p104
      %p106 = scmp.ne.s32.totalorder %s95, %s96
      %p107 = scmp.eq.s32.totalorder %s26, 0
      %p108 = por %p106, %p107
      %p109 = scmp.ne.s32.totalorder %s95, %s96
      %p110 = scmp.eq.s32.totalorder %s27, 3
      %p111 = por %p109, %p110
      %p113 = scmp.ne.s32.totalorder %s96, %s112
      %p114 = scmp.eq.s32.totalorder %s27, 0
      %p115 = por %p113, %p114
      %s116 = smul.u32 %s30, 8
      %s117 = sadd.s32 %s116, 8
      %p118 = scmp.lt.s32.totalorder %s117, 15
      %s119 = scalar_select %p118, %s117, 15
      %s120 = smul.u32 %s39, 8
      %s121 = sadd.s32 %s120, 8
      %p122 = scmp.lt.s32.totalorder %s121, 15
      %s123 = scalar_select %p122, %s121, 15
      %s124 = ssub.s32 %s28, %s47
      %s125 = ssub.s32 %s119, %s123
      %s126 = sor.u32 %s124, %s125
      %s127 = ssub.s32 %s29, %s43
      %s128 = sor.u32 %s126, %s127
      %p129 = scmp.eq.s32.totalorder %s128, 0
      %s131 = sadd.s32 %s130, 1
      %s132 = scalar_select %p129, %s130, %s131
      %p135 = pneg %p129
      %p136 = scmp.eq.s32.totalorder %s21, 3
      %p137 = por %p135, %p136
      %p138 = scmp.ne.s32.totalorder %s130, %s133
      %p139 = scmp.eq.s32.totalorder %s21, 0
      %p140 = por %p138, %p139
      %p141 = scmp.ne.s32.totalorder %s130, %s133
      %p142 = scmp.eq.s32.totalorder %s26, 3
      %p143 = por %p141, %p142
      %p144 = scmp.ne.s32.totalorder %s133, %s134
      %p145 = scmp.eq.s32.totalorder %s26, 0
      %p146 = por %p144, %p145
      %p147 = scmp.ne.s32.totalorder %s133, %s134
      %p148 = scmp.eq.s32.totalorder %s27, 3
      %p149 = por %p147, %p148
      %p151 = scmp.ne.s32.totalorder %s134, %s150
      %p152 = scmp.eq.s32.totalorder %s27, 0
      %p153 = por %p151, %p152
      %s154 = ssub.s32 %s29, %s43
      %p155 = scmp.eq.s32.totalorder %s154, 0
      %s157 = sadd.s32 %s156, 1
      %s158 = scalar_select %p155, %s156, %s157
      %p161 = pneg %p155
      %p162 = scmp.eq.s32.totalorder %s21, 3
      %p163 = por %p161, %p162
      %p164 = scmp.ne.s32.totalorder %s156, %s159
      %p165 = scmp.eq.s32.totalorder %s21, 0
      %p166 = por %p164, %p165
      %p167 = scmp.ne.s32.totalorder %s156, %s159
      %p168 = scmp.eq.s32.totalorder %s26, 3
      %p169 = por %p167, %p168
      %p170 = scmp.ne.s32.totalorder %s159, %s160
      %p171 = scmp.eq.s32.totalorder %s26, 0
      %p172 = por %p170, %p171
      %p173 = scmp.ne.s32.totalorder %s159, %s160
      %p174 = scmp.eq.s32.totalorder %s27, 3
      %p175 = por %p173, %p174
      %p177 = scmp.ne.s32.totalorder %s160, %s176
      %p178 = scmp.eq.s32.totalorder %s27, 0
      %p179 = por %p177, %p178
      %s180 = ssub.s32 %s29, %s43
      %p181 = scmp.eq.s32.totalorder %s180, 0
      %s183 = sadd.s32 %s182, 1
      %s184 = scalar_select %p181, %s182, %s183
      %p187 = pneg %p181
      %p188 = scmp.eq.s32.totalorder %s21, 3
      %p189 = por %p187, %p188
      %p190 = scmp.ne.s32.totalorder %s182, %s185
      %p191 = scmp.eq.s32.totalorder %s21, 0
      %p192 = por %p190, %p191
      %p193 = scmp.ne.s32.totalorder %s182, %s185
      %p194 = scmp.eq.s32.totalorder %s26, 3
      %p195 = por %p193, %p194
      %p196 = scmp.ne.s32.totalorder %s185, %s186
      %p197 = scmp.eq.s32.totalorder %s26, 0
      %p198 = por %p196, %p197
      %p199 = scmp.ne.s32.totalorder %s185, %s186
      %p200 = scmp.eq.s32.totalorder %s27, 3
      %p201 = por %p199, %p200
      %p203 = scmp.ne.s32.totalorder %s186, %s202
      %p204 = scmp.eq.s32.totalorder %s27, 0
      %p205 = por %p203, %p204
      %s207 = sadd.s32 %s206, 1
      %p210 = scmp.eq.s32.totalorder %s21, 3
      %p211 = scmp.ne.s32.totalorder %s206, %s208
      %p212 = scmp.eq.s32.totalorder %s21, 0
      %p213 = por %p211, %p212
      %p214 = scmp.ne.s32.totalorder %s206, %s208
      %p215 = scmp.eq.s32.totalorder %s26, 3
      %p216 = por %p214, %p215
      %p217 = scmp.ne.s32.totalorder %s208, %s209
      %p218 = scmp.eq.s32.totalorder %s26, 0
      %p219 = por %p217, %p218
      %p220 = scmp.ne.s32.totalorder %s208, %s209
      %p221 = scmp.eq.s32.totalorder %s27, 3
      %p222 = por %p220, %p221
      %p224 = scmp.ne.s32.totalorder %s209, %s223
      %p225 = scmp.eq.s32.totalorder %s27, 0
      %p226 = por %p224, %p225
      %s227 = ssub.s32 %s28, %s47
      %s228 = ssub.s32 %s30, %s39
      %s229 = sor.u32 %s227, %s228
      %s230 = ssub.s32 %s29, %s43
      %s231 = sor.u32 %s229, %s230
      %p232 = scmp.eq.s32.totalorder %s231, 0
      %s234 = sadd.s32 %s233, 1
      %s235 = scalar_select %p232, %s233, %s234
      %p238 = pneg %p232
      %p239 = scmp.eq.s32.totalorder %s21, 3
      %p240 = por %p238, %p239
      %p241 = scmp.ne.s32.totalorder %s233, %s236
      %p242 = scmp.eq.s32.totalorder %s21, 0
      %p243 = por %p241, %p242
      %p244 = scmp.ne.s32.totalorder %s233, %s236
      %p245 = scmp.eq.s32.totalorder %s26, 3
      %p246 = por %p244, %p245
      %p247 = scmp.ne.s32.totalorder %s236, %s237
      %p248 = scmp.eq.s32.totalorder %s26, 0
      %p249 = por %p247, %p248
      %p250 = scmp.ne.s32.totalorder %s236, %s237
      %p251 = scmp.eq.s32.totalorder %s27, 3
      %p252 = por %p250, %p251
      %p254 = scmp.ne.s32.totalorder %s237, %s253
      %p255 = scmp.eq.s32.totalorder %s27, 0
      %p256 = por %p254, %p255
      %p257 = scmp.le.s32.totalorder 1, %s21
      %p258 = scmp.lt.s32.totalorder %s21, 5
      %p259 = pnand %p257, %p258
      %p260 = pneg %p259
      // Predicated region
      $region9: #{tpu_custom_call.1} parent=5 // pred_check
        _
      $region10: #{tpu_custom_call.1} parent=5 // pred_check_branch
        %262 = sbr.rel (%p259) target = $region12
      $region11: #{tpu_custom_call.1} parent=5 // pred_region
        %s263 = ssub.s32 %s21, 1
        // Predicated region
        $region13: #{tpu_custom_call.1} parent=11 // pred_check
          %p264 = pneg %p172
        $region14: #{tpu_custom_call.1} parent=11 // pred_check_branch
          %266 = sbr.rel (%p264) target = $region16
        $region15: #{tpu_custom_call.1} parent=11 // pred_region
          %p267 = scmp.lt.s32.totalorder %s32, 0
          %s268 = scalar_select %p267, %s32, 0
          %s269 = smul.addr %s268, 8
          %s270 = scalar_lea.vmem %s3, %s269
        $region16: #{tpu_custom_call.1} parent=11 // pred_fallthru
          _
        // Predicated region
        $region17: #{tpu_custom_call.1} parent=11 // pred_check
          %p271 = pneg %p198
        $region18: #{tpu_custom_call.1} parent=11 // pred_check_branch
          %273 = sbr.rel (%p271) target = $region20
        $region19: #{tpu_custom_call.1} parent=11 // pred_region
          %p274 = scmp.lt.s32.totalorder %s32, 0
          %s275 = scalar_select %p274, %s32, 0
          %s276 = scalar_lea.vmem %s4, %s275
        $region20: #{tpu_custom_call.1} parent=11 // pred_fallthru
          _
        // Predicated region
        $region21: #{tpu_custom_call.1} parent=11 // pred_check
          %p277 = pneg %p219
        $region22: #{tpu_custom_call.1} parent=11 // pred_check_branch
          %279 = sbr.rel (%p277) target = $region24
        $region23: #{tpu_custom_call.1} parent=11 // pred_region
          _
        $region24: #{tpu_custom_call.1} parent=11 // pred_fallthru
          _
      $region12: #{tpu_custom_call.1} parent=5 // pred_fallthru
        _
      %p280 = scmp.lt.s32.totalorder %s21, 4
      // Predicated region
      $region25: #{tpu_custom_call.1} parent=5 // pred_check
        %p281 = pneg %p280
      $region26: #{tpu_custom_call.1} parent=5 // pred_check_branch
        %283 = sbr.rel (%p281) target = $region28
      $region27: #{tpu_custom_call.1} parent=5 // pred_region
        // Predicated region
        $region29: #{tpu_custom_call.1} parent=27 // pred_check
          %p284 = pneg %p64
        $region30: #{tpu_custom_call.1} parent=27 // pred_check_branch
          %286 = sbr.rel (%p284) target = $region32
        $region31: #{tpu_custom_call.1} parent=27 // pred_region
          %s287 = sand.u32 %s54, 1
          %s288 = scalar_lea.sflag [#allocation4], %s287
          %s289 = sand.u32 %s54, 1
          %s290 = smul.addr %s289, 128
          %s291 = scalar_lea.vmem [#allocation3], %s290
          %s292 = smul.u32 16, %s30
          %s294 = ssub.s32 2048, 2048
          %295 = vsyncadd %s288, %s294
          %s296 = sadd.s32 %s29, %s292
          %s297 = smul.addr %s28, 32
          %s298 = sadd.s32 %s296, %s297
          %s299 = smul.addr %s298, 128
          %s300 = scalar_lea.hbm %s0, %s299
          %s301 = sshll.u32 %s291, 4
          %s302 = int_to_ptr.vmem [resolvable:$true] %s301
          %307 = dma.hbm_to_vmem [thread:$0]  %s300, 2048, %s302, %s288, 128, 128, 8
        $region32: #{tpu_custom_call.1} parent=27 // pred_fallthru
          _
        // Predicated region
        $region33: #{tpu_custom_call.1} parent=27 // pred_check
          %p308 = pneg %p102
        $region34: #{tpu_custom_call.1} parent=27 // pred_check_branch
          %310 = sbr.rel (%p308) target = $region36
        $region35: #{tpu_custom_call.1} parent=27 // pred_region
          %s311 = sand.u32 %s21, 1
          %s312 = scalar_lea.sflag [#allocation7], %s311
          %s313 = sand.u32 %s92, 1
          %s314 = smul.addr %s313, 16
          %s315 = scalar_lea.vmem [#allocation6], %s314
          %s316 = smul.u32 %s30, 8
          %s317 = ssub.s32 %s316, 1
          %p318 = scmp.gt.s32.totalorder %s317, 0
          %s319 = scalar_select %p318, %s317, 0
          %s320 = smul.u32 2, %s319
          %s322 = ssub.s32 256, 256
          %323 = vsyncadd %s312, %s322
          %s324 = sadd.s32 %s29, %s320
          %s325 = smul.addr %s28, 32
          %s326 = sadd.s32 %s324, %s325
          %s327 = smul.addr %s326, 128
          %s328 = scalar_lea.hbm %s1, %s327
          %s329 = sshll.u32 %s315, 4
          %s330 = int_to_ptr.vmem [resolvable:$true] %s329
          %335 = dma.hbm_to_vmem [thread:$0]  %s328, 256, %s330, %s312, 128, 128, 8
        $region36: #{tpu_custom_call.1} parent=27 // pred_fallthru
          _
        // Predicated region
        $region37: #{tpu_custom_call.1} parent=27 // pred_check
          %p336 = pneg %p140
        $region38: #{tpu_custom_call.1} parent=27 // pred_check_branch
          %338 = sbr.rel (%p336) target = $region40
        $region39: #{tpu_custom_call.1} parent=27 // pred_region
          %s339 = sand.u32 %s21, 1
          %s340 = scalar_lea.sflag [#allocation7], %s339
          %s341 = sand.u32 %s130, 1
          %s342 = smul.addr %s341, 16
          %s343 = scalar_lea.vmem [#allocation8], %s342
          %s344 = smul.u32 %s30, 8
          %s345 = sadd.s32 %s344, 8
          %p346 = scmp.lt.s32.totalorder %s345, 15
          %s347 = scalar_select %p346, %s345, 15
          %s348 = smul.u32 2, %s347
          %s350 = ssub.s32 256, 256
          %351 = vsyncadd %s340, %s350
          %s352 = sadd.s32 %s29, %s348
          %s353 = smul.addr %s28, 32
          %s354 = sadd.s32 %s352, %s353
          %s355 = smul.addr %s354, 128
          %s356 = scalar_lea.hbm %s2, %s355
          %s357 = sshll.u32 %s343, 4
          %s358 = int_to_ptr.vmem [resolvable:$true] %s357
          %363 = dma.hbm_to_vmem [thread:$0]  %s356, 256, %s358, %s340, 128, 128, 8
        $region40: #{tpu_custom_call.1} parent=27 // pred_fallthru
          _
      $region28: #{tpu_custom_call.1} parent=5 // pred_fallthru
        _
      %p364 = scmp.le.s32.totalorder 1, %s21
      %p365 = scmp.lt.s32.totalorder %s21, 5
      %p366 = pnand %p364, %p365
      %p367 = pneg %p366
      // Predicated region
      $region41: #{tpu_custom_call.1} parent=5 // pred_check
        _
      $region42: #{tpu_custom_call.1} parent=5 // pred_check_branch
        %369 = sbr.rel (%p366) target = $region44
      $region43: #{tpu_custom_call.1} parent=5 // pred_region
        %s370 = ssub.s32 %s21, 1
        %s371 = sand.u32 %s57, 1
        %s372 = scalar_lea.sflag [#allocation4], %s371
        %s373 = sand.u32 %s57, 1
        %s374 = smul.addr %s373, 128
        %s375 = scalar_lea.vmem [#allocation3], %s374
        // Predicated region
        $region45: #{tpu_custom_call.1} parent=43 // pred_check
          %p376 = pneg %p70
        $region46: #{tpu_custom_call.1} parent=43 // pred_check_branch
          %378 = sbr.rel (%p376) target = $region48
        $region47: #{tpu_custom_call.1} parent=43 // pred_region
          %379 = dma.done %s372, 2048
        $region48: #{tpu_custom_call.1} parent=43 // pred_fallthru
          _
        %s380 = sand.u32 %s26, 1
        %s381 = scalar_lea.sflag [#allocation7], %s380
        %s382 = sand.u32 %s95, 1
        %s383 = smul.addr %s382, 16
        %s384 = scalar_lea.vmem [#allocation6], %s383
        // Predicated region
        $region49: #{tpu_custom_call.1} parent=43 // pred_check
          %p385 = pneg %p108
        $region50: #{tpu_custom_call.1} parent=43 // pred_check_branch
          %387 = sbr.rel (%p385) target = $region52
        $region51: #{tpu_custom_call.1} parent=43 // pred_region
          %388 = dma.done %s381, 256
        $region52: #{tpu_custom_call.1} parent=43 // pred_fallthru
          _
        %s389 = sand.u32 %s26, 1
        %s390 = scalar_lea.sflag [#allocation7], %s389
        %s391 = sand.u32 %s133, 1
        %s392 = smul.addr %s391, 16
        %s393 = scalar_lea.vmem [#allocation8], %s392
        // Predicated region
        $region53: #{tpu_custom_call.1} parent=43 // pred_check
          %p394 = pneg %p146
        $region54: #{tpu_custom_call.1} parent=43 // pred_check_branch
          %396 = sbr.rel (%p394) target = $region56
        $region55: #{tpu_custom_call.1} parent=43 // pred_region
          %397 = dma.done %s390, 256
        $region56: #{tpu_custom_call.1} parent=43 // pred_fallthru
          _
        %s398 = sand.u32 %s57, 1
        %s399 = scalar_lea.sflag [#allocation4], %s398
        %s400 = sand.u32 %s57, 1
        %s401 = smul.addr %s400, 128
        %s402 = scalar_lea.vmem [#allocation3], %s401
        %p403 = pneg %p70
        %p404 = pneg %p67
        %s405 = sand.u32 %s26, 1
        %s406 = scalar_lea.sflag [#allocation7], %s405
        %s407 = sand.u32 %s95, 1
        %s408 = smul.addr %s407, 16
        %s409 = scalar_lea.vmem [#allocation6], %s408
        %p410 = pneg %p108
        %p411 = pneg %p105
        %s412 = sand.u32 %s26, 1
        %s413 = scalar_lea.sflag [#allocation7], %s412
        %s414 = sand.u32 %s133, 1
        %s415 = smul.addr %s414, 16
        %s416 = scalar_lea.vmem [#allocation8], %s415
        %p417 = pneg %p146
        %p418 = pneg %p143
        %p419 = scmp.lt.s32.totalorder %s32, 0
        %s420 = scalar_select %p419, %s32, 0
        %s421 = smul.addr %s420, 8
        %s422 = scalar_lea.vmem %s3, %s421
        %p423 = pneg %p172
        %p424 = pneg %p169
        %p425 = scmp.lt.s32.totalorder %s32, 0
        %s426 = scalar_select %p425, %s32, 0
        %s427 = scalar_lea.vmem %s4, %s426
        %p428 = pneg %p198
        %p429 = pneg %p195
        %p430 = pneg %p219
        %p431 = pneg %p216
        %p432 = pneg %p249
        %p433 = pneg %p246
        %s434 = sand.u32 %s236, 1
        %s435 = scalar_lea.sflag [#allocation5], %s434
        %s436 = sand.u32 %s236, 1
        %s437 = smul.addr %s436, 128
        %s438 = scalar_lea.vmem [#allocation9], %s437
        %s439 = smul.u32 16, %s33
        %s440 = smul.u32 %s33, 8
        %s441 = ssub.s32 %s440, 1
        %p442 = scmp.gt.s32.totalorder %s441, 0
        %s443 = scalar_select %p442, %s441, 0
        %s444 = smul.u32 2, %s443
        %s445 = smul.u32 %s33, 8
        %s446 = sadd.s32 %s445, 8
        %p447 = scmp.lt.s32.totalorder %s446, 15
        %s448 = scalar_select %p447, %s446, 15
        %s449 = smul.u32 2, %s448
        %p450 = scmp.lt.s32.totalorder %s32, 0
        %s451 = scalar_select %p450, %s32, 0
        %s452 = smul.addr %s451, 8
        %s453 = scalar_lea.vmem %s3, %s452
        %p454 = scmp.lt.s32.totalorder %s32, 0
        %s455 = scalar_select %p454, %s32, 0
        %s456 = scalar_lea.vmem %s4, %s455
        %s457 = smul.u32 16, %s33
        %p458 = scmp.gt.s32.totalorder %s33, 0
        %v459 = vld [vmem:[%s384] sm:$0xff]
        %v460 = vld [vmem:[%s384 + $0x8] sm:$0xff]
        %s461 = scalar_select %p458, 1, 0
        %v462 = vstv %s461
        %vm463 = vcmp.eq.s32.totalorder %v462, 1
        %v464 = vsel %vm463, %v459, 0.0
        %v465 = vsel %vm463, %v460, 0.0
        %p466 = scmp.lt.s32.totalorder %s33, 1
        %v467 = vld [vmem:[%s393] sm:$0xff]
        %v468 = vld [vmem:[%s393 + $0x8] sm:$0xff]
        %s469 = scalar_select %p466, 1, 0
        %v470 = vstv %s469
        %vm471 = vcmp.eq.s32.totalorder %v470, 1
        %v472 = vsel %vm471, %v467, 0.0
        %v473 = vsel %vm471, %v468, 0.0
        %474 = vst [vmem:[#allocation2] sm:$0xff] %v464
        %475 = vst [vmem:[#allocation2 + $0x8] sm:$0xff] %v465
        %v476 = vld [vmem:[%s375] sm:$0xff]
        %v477 = vld [vmem:[%s375 + $0x8] sm:$0xff]
        %v478 = vld [vmem:[%s375 + $0x10] sm:$0xff]
        %v479 = vld [vmem:[%s375 + $0x18] sm:$0xff]
        %v480 = vld [vmem:[%s375 + $0x20] sm:$0xff]
        %v481 = vld [vmem:[%s375 + $0x28] sm:$0xff]
        %v482 = vld [vmem:[%s375 + $0x30] sm:$0xff]
        %v483 = vld [vmem:[%s375 + $0x38] sm:$0xff]
        %v484 = vld [vmem:[%s375 + $0x40] sm:$0xff]
        %v485 = vld [vmem:[%s375 + $0x48] sm:$0xff]
        %v486 = vld [vmem:[%s375 + $0x50] sm:$0xff]
        %v487 = vld [vmem:[%s375 + $0x58] sm:$0xff]
        %v488 = vld [vmem:[%s375 + $0x60] sm:$0xff]
        %v489 = vld [vmem:[%s375 + $0x68] sm:$0xff]
        %v490 = vld [vmem:[%s375 + $0x70] sm:$0xff]
        %v491 = vld [vmem:[%s375 + $0x78] sm:$0xff]
        %492 = vst [vmem:[#allocation2 + $0x10] sm:$0xff] %v476
        %493 = vst [vmem:[#allocation2 + $0x18] sm:$0xff] %v477
        %494 = vst [vmem:[#allocation2 + $0x20] sm:$0xff] %v478
        %495 = vst [vmem:[#allocation2 + $0x28] sm:$0xff] %v479
        %496 = vst [vmem:[#allocation2 + $0x30] sm:$0xff] %v480
        %497 = vst [vmem:[#allocation2 + $0x38] sm:$0xff] %v481
        %498 = vst [vmem:[#allocation2 + $0x40] sm:$0xff] %v482
        %499 = vst [vmem:[#allocation2 + $0x48] sm:$0xff] %v483
        %500 = vst [vmem:[#allocation2 + $0x50] sm:$0xff] %v484
        %501 = vst [vmem:[#allocation2 + $0x58] sm:$0xff] %v485
        %502 = vst [vmem:[#allocation2 + $0x60] sm:$0xff] %v486
        %503 = vst [vmem:[#allocation2 + $0x68] sm:$0xff] %v487
        %504 = vst [vmem:[#allocation2 + $0x70] sm:$0xff] %v488
        %505 = vst [vmem:[#allocation2 + $0x78] sm:$0xff] %v489
        %506 = vst [vmem:[#allocation2 + $0x80] sm:$0xff] %v490
        %507 = vst [vmem:[#allocation2 + $0x88] sm:$0xff] %v491
        %508 = vst [vmem:[#allocation2 + $0x90] sm:$0xff] %v472
        %509 = vst [vmem:[#allocation2 + $0x98] sm:$0xff] %v473
        %v510 = vld [vmem:[%s453] sm:$0xff]
        %v511 = vld [vmem:[%s453 + $0x8] sm:$0x1]
        %v512 = vld [vmem:[#allocation2] sm:$0xff]
        %v513 = vld [vmem:[#allocation2 + $0x8] sm:$0xff]
        %v514 = vld [vmem:[#allocation2 + $0x10] sm:$0xff]
        %v515 = vld [vmem:[#allocation2 + $0x18] sm:$0xff]
        %v516 = vld [vmem:[#allocation2 + $0x20] sm:$0xff]
        %v517 = vld [vmem:[#allocation2 + $0x28] sm:$0xff]
        %v518 = vld [vmem:[#allocation2 + $0x30] sm:$0xff]
        %v519 = vld [vmem:[#allocation2 + $0x38] sm:$0xff]
        %v520 = vld [vmem:[#allocation2 + $0x40] sm:$0xff]
        %v521 = vld [vmem:[#allocation2 + $0x48] sm:$0xff]
        %v522 = vld [vmem:[#allocation2 + $0x50] sm:$0xff]
        %v523 = vld [vmem:[#allocation2 + $0x58] sm:$0xff]
        %v524 = vld [vmem:[#allocation2 + $0x60] sm:$0xff]
        %v525 = vld [vmem:[#allocation2 + $0x68] sm:$0xff]
        %v526 = vld [vmem:[#allocation2 + $0x70] sm:$0xff]
        %v527 = vld [vmem:[#allocation2 + $0x78] sm:$0xff]
        %v528 = vld [vmem:[%s375] sm:$0xff]
        %v529 = vld [vmem:[%s375 + $0x8] sm:$0xff]
        %v530 = vld [vmem:[%s375 + $0x10] sm:$0xff]
        %v531 = vld [vmem:[%s375 + $0x18] sm:$0xff]
        %v532 = vld [vmem:[%s375 + $0x20] sm:$0xff]
        %v533 = vld [vmem:[%s375 + $0x28] sm:$0xff]
        %v534 = vld [vmem:[%s375 + $0x30] sm:$0xff]
        %v535 = vld [vmem:[%s375 + $0x38] sm:$0xff]
        %v536 = vld [vmem:[%s375 + $0x40] sm:$0xff]
        %v537 = vld [vmem:[%s375 + $0x48] sm:$0xff]
        %v538 = vld [vmem:[%s375 + $0x50] sm:$0xff]
        %v539 = vld [vmem:[%s375 + $0x58] sm:$0xff]
        %v540 = vld [vmem:[%s375 + $0x60] sm:$0xff]
        %v541 = vld [vmem:[%s375 + $0x68] sm:$0xff]
        %v542 = vld [vmem:[%s375 + $0x70] sm:$0xff]
        %v543 = vld [vmem:[%s375 + $0x78] sm:$0xff]
        %v544 = vld [vmem:[#allocation2 + $0x20] sm:$0xff]
        %v545 = vld [vmem:[#allocation2 + $0x28] sm:$0xff]
        %v546 = vld [vmem:[#allocation2 + $0x30] sm:$0xff]
        %v547 = vld [vmem:[#allocation2 + $0x38] sm:$0xff]
        %v548 = vld [vmem:[#allocation2 + $0x40] sm:$0xff]
        %v549 = vld [vmem:[#allocation2 + $0x48] sm:$0xff]
        %v550 = vld [vmem:[#allocation2 + $0x50] sm:$0xff]
        %v551 = vld [vmem:[#allocation2 + $0x58] sm:$0xff]
        %v552 = vld [vmem:[#allocation2 + $0x60] sm:$0xff]
        %v553 = vld [vmem:[#allocation2 + $0x68] sm:$0xff]
        %v554 = vld [vmem:[#allocation2 + $0x70] sm:$0xff]
        %v555 = vld [vmem:[#allocation2 + $0x78] sm:$0xff]
        %v556 = vld [vmem:[#allocation2 + $0x80] sm:$0xff]
        %v557 = vld [vmem:[#allocation2 + $0x88] sm:$0xff]
        %v558 = vld [vmem:[#allocation2 + $0x90] sm:$0xff]
        %v559 = vld [vmem:[#allocation2 + $0x98] sm:$0xff]
        %v560 = vlaneseq
        %v561 = vshrl.u32 %v560, 7
        %v562 = vsub.s32 1, %v561
        %v563 = vrot.slane %v510, %v562
        %v564 = vmul.f32 %v512, %v563
        %v565 = vmul.f32 %v513, %v563
        %v566 = vmul.f32 %v514, %v563
        %v567 = vmul.f32 %v515, %v563
        %v568 = vmul.f32 %v516, %v563
        %v569 = vmul.f32 %v517, %v563
        %v570 = vmul.f32 %v518, %v563
        %v571 = vmul.f32 %v519, %v563
        %v572 = vmul.f32 %v520, %v563
        %v573 = vmul.f32 %v521, %v563
        %v574 = vmul.f32 %v522, %v563
        %v575 = vmul.f32 %v523, %v563
        %v576 = vmul.f32 %v524, %v563
        %v577 = vmul.f32 %v525, %v563
        %v578 = vmul.f32 %v526, %v563
        %v579 = vmul.f32 %v527, %v563
        %v580 = vlaneseq
        %v581 = vshrl.u32 %v580, 7
        %v582 = vsub.s32 4, %v581
        %v583 = vrot.slane %v510, %v582
        %v584 = vmul.f32 %v528, %v583
        %v585 = vmul.f32 %v529, %v583
        %v586 = vmul.f32 %v530, %v583
        %v587 = vmul.f32 %v531, %v583
        %v588 = vmul.f32 %v532, %v583
        %v589 = vmul.f32 %v533, %v583
        %v590 = vmul.f32 %v534, %v583
        %v591 = vmul.f32 %v535, %v583
        %v592 = vmul.f32 %v536, %v583
        %v593 = vmul.f32 %v537, %v583
        %v594 = vmul.f32 %v538, %v583
        %v595 = vmul.f32 %v539, %v583
        %v596 = vmul.f32 %v540, %v583
        %v597 = vmul.f32 %v541, %v583
        %v598 = vmul.f32 %v542, %v583
        %v599 = vmul.f32 %v543, %v583
        %v600 = vadd.f32 %v564, %v584
        %v601 = vadd.f32 %v565, %v585
        %v602 = vadd.f32 %v566, %v586
        %v603 = vadd.f32 %v567, %v587
        %v604 = vadd.f32 %v568, %v588
        %v605 = vadd.f32 %v569, %v589
        %v606 = vadd.f32 %v570, %v590
        %v607 = vadd.f32 %v571, %v591
        %v608 = vadd.f32 %v572, %v592
        %v609 = vadd.f32 %v573, %v593
        %v610 = vadd.f32 %v574, %v594
        %v611 = vadd.f32 %v575, %v595
        %v612 = vadd.f32 %v576, %v596
        %v613 = vadd.f32 %v577, %v597
        %v614 = vadd.f32 %v578, %v598
        %v615 = vadd.f32 %v579, %v599
        %v616 = vlaneseq
        %v617 = vshrl.u32 %v616, 7
        %v618 = vsub.s32 7, %v617
        %v619 = vrot.slane %v510, %v618
        %v620 = vmul.f32 %v544, %v619
        %v621 = vmul.f32 %v545, %v619
        %v622 = vmul.f32 %v546, %v619
        %v623 = vmul.f32 %v547, %v619
        %v624 = vmul.f32 %v548, %v619
        %v625 = vmul.f32 %v549, %v619
        %v626 = vmul.f32 %v550, %v619
        %v627 = vmul.f32 %v551, %v619
        %v628 = vmul.f32 %v552, %v619
        %v629 = vmul.f32 %v553, %v619
        %v630 = vmul.f32 %v554, %v619
        %v631 = vmul.f32 %v555, %v619
        %v632 = vmul.f32 %v556, %v619
        %v633 = vmul.f32 %v557, %v619
        %v634 = vmul.f32 %v558, %v619
        %v635 = vmul.f32 %v559, %v619
        %v636 = vadd.f32 %v600, %v620
        %v637 = vadd.f32 %v601, %v621
        %v638 = vadd.f32 %v602, %v622
        %v639 = vadd.f32 %v603, %v623
        %v640 = vadd.f32 %v604, %v624
        %v641 = vadd.f32 %v605, %v625
        %v642 = vadd.f32 %v606, %v626
        %v643 = vadd.f32 %v607, %v627
        %v644 = vadd.f32 %v608, %v628
        %v645 = vadd.f32 %v609, %v629
        %v646 = vadd.f32 %v610, %v630
        %v647 = vadd.f32 %v611, %v631
        %v648 = vadd.f32 %v612, %v632
        %v649 = vadd.f32 %v613, %v633
        %v650 = vadd.f32 %v614, %v634
        %v651 = vadd.f32 %v615, %v635
        %v652 = vlaneseq
        %v653 = vshrl.u32 %v652, 7
        %v654 = vsub.s32 0, %v653
        %v655 = vrot.slane %v510, %v654
        %v656 = vmul.f32 %v512, %v655
        %v657 = vmul.f32 %v513, %v655
        %v658 = vmul.f32 %v514, %v655
        %v659 = vmul.f32 %v515, %v655
        %v660 = vmul.f32 %v516, %v655
        %v661 = vmul.f32 %v517, %v655
        %v662 = vmul.f32 %v518, %v655
        %v663 = vmul.f32 %v519, %v655
        %v664 = vmul.f32 %v520, %v655
        %v665 = vmul.f32 %v521, %v655
        %v666 = vmul.f32 %v522, %v655
        %v667 = vmul.f32 %v523, %v655
        %v668 = vmul.f32 %v524, %v655
        %v669 = vmul.f32 %v525, %v655
        %v670 = vmul.f32 %v526, %v655
        %v671 = vmul.f32 %v527, %v655
        %v672 = vlaneseq
        %v673 = vshrl.u32 %v672, 7
        %v674 = vsub.s32 3, %v673
        %v675 = vrot.slane %v510, %v674
        %v676 = vmul.f32 %v528, %v675
        %v677 = vmul.f32 %v529, %v675
        %v678 = vmul.f32 %v530, %v675
        %v679 = vmul.f32 %v531, %v675
        %v680 = vmul.f32 %v532, %v675
        %v681 = vmul.f32 %v533, %v675
        %v682 = vmul.f32 %v534, %v675
        %v683 = vmul.f32 %v535, %v675
        %v684 = vmul.f32 %v536, %v675
        %v685 = vmul.f32 %v537, %v675
        %v686 = vmul.f32 %v538, %v675
        %v687 = vmul.f32 %v539, %v675
        %v688 = vmul.f32 %v540, %v675
        %v689 = vmul.f32 %v541, %v675
        %v690 = vmul.f32 %v542, %v675
        %v691 = vmul.f32 %v543, %v675
        %v692 = vadd.f32 %v656, %v676
        %v693 = vadd.f32 %v657, %v677
        %v694 = vadd.f32 %v658, %v678
        %v695 = vadd.f32 %v659, %v679
        %v696 = vadd.f32 %v660, %v680
        %v697 = vadd.f32 %v661, %v681
        %v698 = vadd.f32 %v662, %v682
        %v699 = vadd.f32 %v663, %v683
        %v700 = vadd.f32 %v664, %v684
        %v701 = vadd.f32 %v665, %v685
        %v702 = vadd.f32 %v666, %v686
        %v703 = vadd.f32 %v667, %v687
        %v704 = vadd.f32 %v668, %v688
        %v705 = vadd.f32 %v669, %v689
        %v706 = vadd.f32 %v670, %v690
        %v707 = vadd.f32 %v671, %v691
        %v708 = vlaneseq
        %v709 = vshrl.u32 %v708, 7
        %v710 = vsub.s32 6, %v709
        %v711 = vrot.slane %v510, %v710
        %v712 = vmul.f32 %v544, %v711
        %v713 = vmul.f32 %v545, %v711
        %v714 = vmul.f32 %v546, %v711
        %v715 = vmul.f32 %v547, %v711
        %v716 = vmul.f32 %v548, %v711
        %v717 = vmul.f32 %v549, %v711
        %v718 = vmul.f32 %v550, %v711
        %v719 = vmul.f32 %v551, %v711
        %v720 = vmul.f32 %v552, %v711
        %v721 = vmul.f32 %v553, %v711
        %v722 = vmul.f32 %v554, %v711
        %v723 = vmul.f32 %v555, %v711
        %v724 = vmul.f32 %v556, %v711
        %v725 = vmul.f32 %v557, %v711
        %v726 = vmul.f32 %v558, %v711
        %v727 = vmul.f32 %v559, %v711
        %v728 = vadd.f32 %v692, %v712
        %v729 = vadd.f32 %v693, %v713
        %v730 = vadd.f32 %v694, %v714
        %v731 = vadd.f32 %v695, %v715
        %v732 = vadd.f32 %v696, %v716
        %v733 = vadd.f32 %v697, %v717
        %v734 = vadd.f32 %v698, %v718
        %v735 = vadd.f32 %v699, %v719
        %v736 = vadd.f32 %v700, %v720
        %v737 = vadd.f32 %v701, %v721
        %v738 = vadd.f32 %v702, %v722
        %v739 = vadd.f32 %v703, %v723
        %v740 = vadd.f32 %v704, %v724
        %v741 = vadd.f32 %v705, %v725
        %v742 = vadd.f32 %v706, %v726
        %v743 = vadd.f32 %v707, %v727
        %v744 = vlaneseq
        %v745 = vshrl.u32 %v744, 7
        %v746 = vsub.s32 2, %v745
        %v747 = vrot.slane %v510, %v746
        %v748 = vmul.f32 %v512, %v747
        %v749 = vmul.f32 %v513, %v747
        %v750 = vmul.f32 %v514, %v747
        %v751 = vmul.f32 %v515, %v747
        %v752 = vmul.f32 %v516, %v747
        %v753 = vmul.f32 %v517, %v747
        %v754 = vmul.f32 %v518, %v747
        %v755 = vmul.f32 %v519, %v747
        %v756 = vmul.f32 %v520, %v747
        %v757 = vmul.f32 %v521, %v747
        %v758 = vmul.f32 %v522, %v747
        %v759 = vmul.f32 %v523, %v747
        %v760 = vmul.f32 %v524, %v747
        %v761 = vmul.f32 %v525, %v747
        %v762 = vmul.f32 %v526, %v747
        %v763 = vmul.f32 %v527, %v747
        %v764 = vlaneseq
        %v765 = vshrl.u32 %v764, 7
        %v766 = vsub.s32 5, %v765
        %v767 = vrot.slane %v510, %v766
        %v768 = vmul.f32 %v528, %v767
        %v769 = vmul.f32 %v529, %v767
        %v770 = vmul.f32 %v530, %v767
        %v771 = vmul.f32 %v531, %v767
        %v772 = vmul.f32 %v532, %v767
        %v773 = vmul.f32 %v533, %v767
        %v774 = vmul.f32 %v534, %v767
        %v775 = vmul.f32 %v535, %v767
        %v776 = vmul.f32 %v536, %v767
        %v777 = vmul.f32 %v537, %v767
        %v778 = vmul.f32 %v538, %v767
        %v779 = vmul.f32 %v539, %v767
        %v780 = vmul.f32 %v540, %v767
        %v781 = vmul.f32 %v541, %v767
        %v782 = vmul.f32 %v542, %v767
        %v783 = vmul.f32 %v543, %v767
        %v784 = vadd.f32 %v748, %v768
        %v785 = vadd.f32 %v749, %v769
        %v786 = vadd.f32 %v750, %v770
        %v787 = vadd.f32 %v751, %v771
        %v788 = vadd.f32 %v752, %v772
        %v789 = vadd.f32 %v753, %v773
        %v790 = vadd.f32 %v754, %v774
        %v791 = vadd.f32 %v755, %v775
        %v792 = vadd.f32 %v756, %v776
        %v793 = vadd.f32 %v757, %v777
        %v794 = vadd.f32 %v758, %v778
        %v795 = vadd.f32 %v759, %v779
        %v796 = vadd.f32 %v760, %v780
        %v797 = vadd.f32 %v761, %v781
        %v798 = vadd.f32 %v762, %v782
        %v799 = vadd.f32 %v763, %v783
        %v800 = vlaneseq
        %v801 = vshrl.u32 %v800, 7
        %v802 = vsub.s32 0, %v801
        %v803 = vrot.slane %v511, %v802
        %v804 = vmul.f32 %v544, %v803
        %v805 = vmul.f32 %v545, %v803
        %v806 = vmul.f32 %v546, %v803
        %v807 = vmul.f32 %v547, %v803
        %v808 = vmul.f32 %v548, %v803
        %v809 = vmul.f32 %v549, %v803
        %v810 = vmul.f32 %v550, %v803
        %v811 = vmul.f32 %v551, %v803
        %v812 = vmul.f32 %v552, %v803
        %v813 = vmul.f32 %v553, %v803
        %v814 = vmul.f32 %v554, %v803
        %v815 = vmul.f32 %v555, %v803
        %v816 = vmul.f32 %v556, %v803
        %v817 = vmul.f32 %v557, %v803
        %v818 = vmul.f32 %v558, %v803
        %v819 = vmul.f32 %v559, %v803
        %v820 = vadd.f32 %v784, %v804
        %v821 = vadd.f32 %v785, %v805
        %v822 = vadd.f32 %v786, %v806
        %v823 = vadd.f32 %v787, %v807
        %v824 = vadd.f32 %v788, %v808
        %v825 = vadd.f32 %v789, %v809
        %v826 = vadd.f32 %v790, %v810
        %v827 = vadd.f32 %v791, %v811
        %v828 = vadd.f32 %v792, %v812
        %v829 = vadd.f32 %v793, %v813
        %v830 = vadd.f32 %v794, %v814
        %v831 = vadd.f32 %v795, %v815
        %v832 = vadd.f32 %v796, %v816
        %v833 = vadd.f32 %v797, %v817
        %v834 = vadd.f32 %v798, %v818
        %v835 = vadd.f32 %v799, %v819
        %v836 = vld [vmem:[%s5] sm:$0xff]
        %v837 = vld [vmem:[%s5 + $0x8] sm:$0xff]
        %v838 = vld [vmem:[%s5 + $0x10] sm:$0xff]
        %v839 = vld [vmem:[%s5 + $0x18] sm:$0xff]
        %v840 = vld [vmem:[%s5 + $0x20] sm:$0xff]
        %v841 = vld [vmem:[%s5 + $0x28] sm:$0xff]
        %v842 = vld [vmem:[%s5 + $0x30] sm:$0xff]
        %v843 = vld [vmem:[%s5 + $0x38] sm:$0xff]
        %v844 = vld [vmem:[%s5 + $0x40] sm:$0xff]
        %v845 = vld [vmem:[%s5 + $0x48] sm:$0xff]
        %v846 = vld [vmem:[%s5 + $0x50] sm:$0xff]
        %v847 = vld [vmem:[%s5 + $0x58] sm:$0xff]
        %v848 = vld [vmem:[%s5 + $0x60] sm:$0xff]
        %v849 = vld [vmem:[%s5 + $0x68] sm:$0xff]
        %v850 = vld [vmem:[%s5 + $0x70] sm:$0xff]
        %v851 = vld [vmem:[%s5 + $0x78] sm:$0xff]
        %vm852 = vcmp.eq.s32.totalorder %v836, 0
        %vm853 = vcmp.eq.s32.totalorder %v837, 0
        %vm854 = vcmp.eq.s32.totalorder %v838, 0
        %vm855 = vcmp.eq.s32.totalorder %v839, 0
        %vm856 = vcmp.eq.s32.totalorder %v840, 0
        %vm857 = vcmp.eq.s32.totalorder %v841, 0
        %vm858 = vcmp.eq.s32.totalorder %v842, 0
        %vm859 = vcmp.eq.s32.totalorder %v843, 0
        %vm860 = vcmp.eq.s32.totalorder %v844, 0
        %vm861 = vcmp.eq.s32.totalorder %v845, 0
        %vm862 = vcmp.eq.s32.totalorder %v846, 0
        %vm863 = vcmp.eq.s32.totalorder %v847, 0
        %vm864 = vcmp.eq.s32.totalorder %v848, 0
        %vm865 = vcmp.eq.s32.totalorder %v849, 0
        %vm866 = vcmp.eq.s32.totalorder %v850, 0
        %vm867 = vcmp.eq.s32.totalorder %v851, 0
        %v868 = vrot.slane %v728, 7
        %v869 = vrot.slane %v729, 7
        %v870 = vrot.slane %v730, 7
        %v871 = vrot.slane %v731, 7
        %v872 = vrot.slane %v732, 7
        %v873 = vrot.slane %v733, 7
        %v874 = vrot.slane %v734, 7
        %v875 = vrot.slane %v735, 7
        %v876 = vrot.slane %v736, 7
        %v877 = vrot.slane %v737, 7
        %v878 = vrot.slane %v738, 7
        %v879 = vrot.slane %v739, 7
        %v880 = vrot.slane %v740, 7
        %v881 = vrot.slane %v741, 7
        %v882 = vrot.slane %v742, 7
        %v883 = vrot.slane %v743, 7
        %v884 = vlaneseq
        %v885 = vshrl.u32 %v884, 7
        %vm886 = vcmp.lt.s32.totalorder %v885, 1
        %v887 = vsel %vm886, %v882, %v883
        %v888 = vsel %vm886, %v881, %v882
        %v889 = vsel %vm886, %v880, %v881
        %v890 = vsel %vm886, %v879, %v880
        %v891 = vsel %vm886, %v878, %v879
        %v892 = vsel %vm886, %v877, %v878
        %v893 = vsel %vm886, %v876, %v877
        %v894 = vsel %vm886, %v875, %v876
        %v895 = vsel %vm886, %v874, %v875
        %v896 = vsel %vm886, %v873, %v874
        %v897 = vsel %vm886, %v872, %v873
        %v898 = vsel %vm886, %v871, %v872
        %v899 = vsel %vm886, %v870, %v871
        %v900 = vsel %vm886, %v869, %v870
        %v901 = vsel %vm886, %v868, %v869
        %v902 = vsel %vm886, %v883, %v868
        %v903 = vsel %vm852, 1, 0
        %v904 = vsel %vm853, 1, 0
        %v905 = vsel %vm854, 1, 0
        %v906 = vsel %vm855, 1, 0
        %v907 = vsel %vm856, 1, 0
        %v908 = vsel %vm857, 1, 0
        %v909 = vsel %vm858, 1, 0
        %v910 = vsel %vm859, 1, 0
        %v911 = vsel %vm860, 1, 0
        %v912 = vsel %vm861, 1, 0
        %v913 = vsel %vm862, 1, 0
        %v914 = vsel %vm863, 1, 0
        %v915 = vsel %vm864, 1, 0
        %v916 = vsel %vm865, 1, 0
        %v917 = vsel %vm866, 1, 0
        %v918 = vsel %vm867, 1, 0
        %919 = vset.pattern.permute.xlu0 0
        %920 = vperm.xlu0 %919, %v903
        %v921 = vpop.permute.xlu0 %920
        %922 = vset.pattern.permute.xlu0 0
        %923 = vperm.xlu0 %922, %v904
        %v924 = vpop.permute.xlu0 %923
        %925 = vset.pattern.permute.xlu0 0
        %926 = vperm.xlu0 %925, %v905
        %v927 = vpop.permute.xlu0 %926
        %928 = vset.pattern.permute.xlu0 0
        %929 = vperm.xlu0 %928, %v906
        %v930 = vpop.permute.xlu0 %929
        %931 = vset.pattern.permute.xlu0 0
        %932 = vperm.xlu0 %931, %v907
        %v933 = vpop.permute.xlu0 %932
        %934 = vset.pattern.permute.xlu0 0
        %935 = vperm.xlu0 %934, %v908
        %v936 = vpop.permute.xlu0 %935
        %937 = vset.pattern.permute.xlu0 0
        %938 = vperm.xlu0 %937, %v909
        %v939 = vpop.permute.xlu0 %938
        %940 = vset.pattern.permute.xlu0 0
        %941 = vperm.xlu0 %940, %v910
        %v942 = vpop.permute.xlu0 %941
        %943 = vset.pattern.permute.xlu0 0
        %944 = vperm.xlu0 %943, %v911
        %v945 = vpop.permute.xlu0 %944
        %946 = vset.pattern.permute.xlu0 0
        %947 = vperm.xlu0 %946, %v912
        %v948 = vpop.permute.xlu0 %947
        %949 = vset.pattern.permute.xlu0 0
        %950 = vperm.xlu0 %949, %v913
        %v951 = vpop.permute.xlu0 %950
        %952 = vset.pattern.permute.xlu0 0
        %953 = vperm.xlu0 %952, %v914
        %v954 = vpop.permute.xlu0 %953
        %955 = vset.pattern.permute.xlu0 0
        %956 = vperm.xlu0 %955, %v915
        %v957 = vpop.permute.xlu0 %956
        %958 = vset.pattern.permute.xlu0 0
        %959 = vperm.xlu0 %958, %v916
        %v960 = vpop.permute.xlu0 %959
        %961 = vset.pattern.permute.xlu0 0
        %962 = vperm.xlu0 %961, %v917
        %v963 = vpop.permute.xlu0 %962
        %964 = vset.pattern.permute.xlu0 0
        %965 = vperm.xlu0 %964, %v918
        %v966 = vpop.permute.xlu0 %965
        %vm967 = vcmp.eq.s32.totalorder %v921, 1
        %vm968 = vcmp.eq.s32.totalorder %v924, 1
        %vm969 = vcmp.eq.s32.totalorder %v927, 1
        %vm970 = vcmp.eq.s32.totalorder %v930, 1
        %vm971 = vcmp.eq.s32.totalorder %v933, 1
        %vm972 = vcmp.eq.s32.totalorder %v936, 1
        %vm973 = vcmp.eq.s32.totalorder %v939, 1
        %vm974 = vcmp.eq.s32.totalorder %v942, 1
        %vm975 = vcmp.eq.s32.totalorder %v945, 1
        %vm976 = vcmp.eq.s32.totalorder %v948, 1
        %vm977 = vcmp.eq.s32.totalorder %v951, 1
        %vm978 = vcmp.eq.s32.totalorder %v954, 1
        %vm979 = vcmp.eq.s32.totalorder %v957, 1
        %vm980 = vcmp.eq.s32.totalorder %v960, 1
        %vm981 = vcmp.eq.s32.totalorder %v963, 1
        %vm982 = vcmp.eq.s32.totalorder %v966, 1
        %v983 = vsel %vm967, 0.0, %v902
        %v984 = vsel %vm968, 0.0, %v901
        %v985 = vsel %vm969, 0.0, %v900
        %v986 = vsel %vm970, 0.0, %v899
        %v987 = vsel %vm971, 0.0, %v898
        %v988 = vsel %vm972, 0.0, %v897
        %v989 = vsel %vm973, 0.0, %v896
        %v990 = vsel %vm974, 0.0, %v895
        %v991 = vsel %vm975, 0.0, %v894
        %v992 = vsel %vm976, 0.0, %v893
        %v993 = vsel %vm977, 0.0, %v892
        %v994 = vsel %vm978, 0.0, %v891
        %v995 = vsel %vm979, 0.0, %v890
        %v996 = vsel %vm980, 0.0, %v889
        %v997 = vsel %vm981, 0.0, %v888
        %v998 = vsel %vm982, 0.0, %v887
        %vm999 = vcmp.eq.s32.totalorder %v836, 15
        %vm1000 = vcmp.eq.s32.totalorder %v837, 15
        %vm1001 = vcmp.eq.s32.totalorder %v838, 15
        %vm1002 = vcmp.eq.s32.totalorder %v839, 15
        %vm1003 = vcmp.eq.s32.totalorder %v840, 15
        %vm1004 = vcmp.eq.s32.totalorder %v841, 15
        %vm1005 = vcmp.eq.s32.totalorder %v842, 15
        %vm1006 = vcmp.eq.s32.totalorder %v843, 15
        %vm1007 = vcmp.eq.s32.totalorder %v844, 15
        %vm1008 = vcmp.eq.s32.totalorder %v845, 15
        %vm1009 = vcmp.eq.s32.totalorder %v846, 15
        %vm1010 = vcmp.eq.s32.totalorder %v847, 15
        %vm1011 = vcmp.eq.s32.totalorder %v848, 15
        %vm1012 = vcmp.eq.s32.totalorder %v849, 15
        %vm1013 = vcmp.eq.s32.totalorder %v850, 15
        %vm1014 = vcmp.eq.s32.totalorder %v851, 15
        %v1015 = vrot.slane %v820, 1
        %v1016 = vrot.slane %v821, 1
        %v1017 = vrot.slane %v822, 1
        %v1018 = vrot.slane %v823, 1
        %v1019 = vrot.slane %v824, 1
        %v1020 = vrot.slane %v825, 1
        %v1021 = vrot.slane %v826, 1
        %v1022 = vrot.slane %v827, 1
        %v1023 = vrot.slane %v828, 1
        %v1024 = vrot.slane %v829, 1
        %v1025 = vrot.slane %v830, 1
        %v1026 = vrot.slane %v831, 1
        %v1027 = vrot.slane %v832, 1
        %v1028 = vrot.slane %v833, 1
        %v1029 = vrot.slane %v834, 1
        %v1030 = vrot.slane %v835, 1
        %vm1031 = vcmp.lt.s32.totalorder %v885, 7
        %v1032 = vsel %vm1031, %v1029, %v1030
        %v1033 = vsel %vm1031, %v1028, %v1029
        %v1034 = vsel %vm1031, %v1027, %v1028
        %v1035 = vsel %vm1031, %v1026, %v1027
        %v1036 = vsel %vm1031, %v1025, %v1026
        %v1037 = vsel %vm1031, %v1024, %v1025
        %v1038 = vsel %vm1031, %v1023, %v1024
        %v1039 = vsel %vm1031, %v1022, %v1023
        %v1040 = vsel %vm1031, %v1021, %v1022
        %v1041 = vsel %vm1031, %v1020, %v1021
        %v1042 = vsel %vm1031, %v1019, %v1020
        %v1043 = vsel %vm1031, %v1018, %v1019
        %v1044 = vsel %vm1031, %v1017, %v1018
        %v1045 = vsel %vm1031, %v1016, %v1017
        %v1046 = vsel %vm1031, %v1015, %v1016
        %v1047 = vsel %vm1031, %v1030, %v1015
        %v1048 = vsel %vm999, 1, 0
        %v1049 = vsel %vm1000, 1, 0
        %v1050 = vsel %vm1001, 1, 0
        %v1051 = vsel %vm1002, 1, 0
        %v1052 = vsel %vm1003, 1, 0
        %v1053 = vsel %vm1004, 1, 0
        %v1054 = vsel %vm1005, 1, 0
        %v1055 = vsel %vm1006, 1, 0
        %v1056 = vsel %vm1007, 1, 0
        %v1057 = vsel %vm1008, 1, 0
        %v1058 = vsel %vm1009, 1, 0
        %v1059 = vsel %vm1010, 1, 0
        %v1060 = vsel %vm1011, 1, 0
        %v1061 = vsel %vm1012, 1, 0
        %v1062 = vsel %vm1013, 1, 0
        %v1063 = vsel %vm1014, 1, 0
        %1064 = vset.pattern.permute.xlu0 0
        %1065 = vperm.xlu0 %1064, %v1048
        %v1066 = vpop.permute.xlu0 %1065
        %1067 = vset.pattern.permute.xlu0 0
        %1068 = vperm.xlu0 %1067, %v1049
        %v1069 = vpop.permute.xlu0 %1068
        %1070 = vset.pattern.permute.xlu0 0
        %1071 = vperm.xlu0 %1070, %v1050
        %v1072 = vpop.permute.xlu0 %1071
        %1073 = vset.pattern.permute.xlu0 0
        %1074 = vperm.xlu0 %1073, %v1051
        %v1075 = vpop.permute.xlu0 %1074
        %1076 = vset.pattern.permute.xlu0 0
        %1077 = vperm.xlu0 %1076, %v1052
        %v1078 = vpop.permute.xlu0 %1077
        %1079 = vset.pattern.permute.xlu0 0
        %1080 = vperm.xlu0 %1079, %v1053
        %v1081 = vpop.permute.xlu0 %1080
        %1082 = vset.pattern.permute.xlu0 0
        %1083 = vperm.xlu0 %1082, %v1054
        %v1084 = vpop.permute.xlu0 %1083
        %1085 = vset.pattern.permute.xlu0 0
        %1086 = vperm.xlu0 %1085, %v1055
        %v1087 = vpop.permute.xlu0 %1086
        %1088 = vset.pattern.permute.xlu0 0
        %1089 = vperm.xlu0 %1088, %v1056
        %v1090 = vpop.permute.xlu0 %1089
        %1091 = vset.pattern.permute.xlu0 0
        %1092 = vperm.xlu0 %1091, %v1057
        %v1093 = vpop.permute.xlu0 %1092
        %1094 = vset.pattern.permute.xlu0 0
        %1095 = vperm.xlu0 %1094, %v1058
        %v1096 = vpop.permute.xlu0 %1095
        %1097 = vset.pattern.permute.xlu0 0
        %1098 = vperm.xlu0 %1097, %v1059
        %v1099 = vpop.permute.xlu0 %1098
        %1100 = vset.pattern.permute.xlu0 0
        %1101 = vperm.xlu0 %1100, %v1060
        %v1102 = vpop.permute.xlu0 %1101
        %1103 = vset.pattern.permute.xlu0 0
        %1104 = vperm.xlu0 %1103, %v1061
        %v1105 = vpop.permute.xlu0 %1104
        %1106 = vset.pattern.permute.xlu0 0
        %1107 = vperm.xlu0 %1106, %v1062
        %v1108 = vpop.permute.xlu0 %1107
        %1109 = vset.pattern.permute.xlu0 0
        %1110 = vperm.xlu0 %1109, %v1063
        %v1111 = vpop.permute.xlu0 %1110
        %vm1112 = vcmp.eq.s32.totalorder %v1066, 1
        %vm1113 = vcmp.eq.s32.totalorder %v1069, 1
        %vm1114 = vcmp.eq.s32.totalorder %v1072, 1
        %vm1115 = vcmp.eq.s32.totalorder %v1075, 1
        %vm1116 = vcmp.eq.s32.totalorder %v1078, 1
        %vm1117 = vcmp.eq.s32.totalorder %v1081, 1
        %vm1118 = vcmp.eq.s32.totalorder %v1084, 1
        %vm1119 = vcmp.eq.s32.totalorder %v1087, 1
        %vm1120 = vcmp.eq.s32.totalorder %v1090, 1
        %vm1121 = vcmp.eq.s32.totalorder %v1093, 1
        %vm1122 = vcmp.eq.s32.totalorder %v1096, 1
        %vm1123 = vcmp.eq.s32.totalorder %v1099, 1
        %vm1124 = vcmp.eq.s32.totalorder %v1102, 1
        %vm1125 = vcmp.eq.s32.totalorder %v1105, 1
        %vm1126 = vcmp.eq.s32.totalorder %v1108, 1
        %vm1127 = vcmp.eq.s32.totalorder %v1111, 1
        %v1128 = vsel %vm1112, 0.0, %v1046
        %v1129 = vsel %vm1113, 0.0, %v1045
        %v1130 = vsel %vm1114, 0.0, %v1044
        %v1131 = vsel %vm1115, 0.0, %v1043
        %v1132 = vsel %vm1116, 0.0, %v1042
        %v1133 = vsel %vm1117, 0.0, %v1041
        %v1134 = vsel %vm1118, 0.0, %v1040
        %v1135 = vsel %vm1119, 0.0, %v1039
        %v1136 = vsel %vm1120, 0.0, %v1038
        %v1137 = vsel %vm1121, 0.0, %v1037
        %v1138 = vsel %vm1122, 0.0, %v1036
        %v1139 = vsel %vm1123, 0.0, %v1035
        %v1140 = vsel %vm1124, 0.0, %v1034
        %v1141 = vsel %vm1125, 0.0, %v1033
        %v1142 = vsel %vm1126, 0.0, %v1032
        %v1143 = vsel %vm1127, 0.0, %v1047
        %v1144 = vadd.f32 %v636, %v983
        %v1145 = vadd.f32 %v637, %v984
        %v1146 = vadd.f32 %v638, %v985
        %v1147 = vadd.f32 %v639, %v986
        %v1148 = vadd.f32 %v640, %v987
        %v1149 = vadd.f32 %v641, %v988
        %v1150 = vadd.f32 %v642, %v989
        %v1151 = vadd.f32 %v643, %v990
        %v1152 = vadd.f32 %v644, %v991
        %v1153 = vadd.f32 %v645, %v992
        %v1154 = vadd.f32 %v646, %v993
        %v1155 = vadd.f32 %v647, %v994
        %v1156 = vadd.f32 %v648, %v995
        %v1157 = vadd.f32 %v649, %v996
        %v1158 = vadd.f32 %v650, %v997
        %v1159 = vadd.f32 %v651, %v998
        %v1160 = vadd.f32 %v1144, %v1128
        %v1161 = vadd.f32 %v1145, %v1129
        %v1162 = vadd.f32 %v1146, %v1130
        %v1163 = vadd.f32 %v1147, %v1131
        %v1164 = vadd.f32 %v1148, %v1132
        %v1165 = vadd.f32 %v1149, %v1133
        %v1166 = vadd.f32 %v1150, %v1134
        %v1167 = vadd.f32 %v1151, %v1135
        %v1168 = vadd.f32 %v1152, %v1136
        %v1169 = vadd.f32 %v1153, %v1137
        %v1170 = vadd.f32 %v1154, %v1138
        %v1171 = vadd.f32 %v1155, %v1139
        %v1172 = vadd.f32 %v1156, %v1140
        %v1173 = vadd.f32 %v1157, %v1141
        %v1174 = vadd.f32 %v1158, %v1142
        %v1175 = vadd.f32 %v1159, %v1143
        %v1176 = vld [vmem:[%s456] sm:$0x1]
        %v1178 = vlaneseq
        %v1179 = vshrl.u32 %v1178, 7
        %v1180 = vsub.s32 0, %v1179
        %v1181 = vrot.slane %v1176, %v1180
        %v1183 = vadd.f32 %v1160, %v1181
        %v1184 = vadd.f32 %v1161, %v1181
        %v1185 = vadd.f32 %v1162, %v1181
        %v1186 = vadd.f32 %v1163, %v1181
        %v1187 = vadd.f32 %v1164, %v1181
        %v1188 = vadd.f32 %v1165, %v1181
        %v1189 = vadd.f32 %v1166, %v1181
        %v1190 = vadd.f32 %v1167, %v1181
        %v1191 = vadd.f32 %v1168, %v1181
        %v1192 = vadd.f32 %v1169, %v1181
        %v1193 = vadd.f32 %v1170, %v1181
        %v1194 = vadd.f32 %v1171, %v1181
        %v1195 = vadd.f32 %v1172, %v1181
        %v1196 = vadd.f32 %v1173, %v1181
        %v1197 = vadd.f32 %v1174, %v1181
        %v1198 = vadd.f32 %v1175, %v1181
        %1199 = vst [vmem:[%s438] sm:$0xff] %v1183
        %1200 = vst [vmem:[%s438 + $0x8] sm:$0xff] %v1184
        %1201 = vst [vmem:[%s438 + $0x10] sm:$0xff] %v1185
        %1202 = vst [vmem:[%s438 + $0x18] sm:$0xff] %v1186
        %1203 = vst [vmem:[%s438 + $0x20] sm:$0xff] %v1187
        %1204 = vst [vmem:[%s438 + $0x28] sm:$0xff] %v1188
        %1205 = vst [vmem:[%s438 + $0x30] sm:$0xff] %v1189
        %1206 = vst [vmem:[%s438 + $0x38] sm:$0xff] %v1190
        %1207 = vst [vmem:[%s438 + $0x40] sm:$0xff] %v1191
        %1208 = vst [vmem:[%s438 + $0x48] sm:$0xff] %v1192
        %1209 = vst [vmem:[%s438 + $0x50] sm:$0xff] %v1193
        %1210 = vst [vmem:[%s438 + $0x58] sm:$0xff] %v1194
        %1211 = vst [vmem:[%s438 + $0x60] sm:$0xff] %v1195
        %1212 = vst [vmem:[%s438 + $0x68] sm:$0xff] %v1196
        %1213 = vst [vmem:[%s438 + $0x70] sm:$0xff] %v1197
        %1214 = vst [vmem:[%s438 + $0x78] sm:$0xff] %v1198
        %s1215 = sand.u32 %s236, 1
        %s1216 = scalar_lea.sflag [#allocation5], %s1215
        %s1217 = sand.u32 %s236, 1
        %s1218 = smul.addr %s1217, 128
        %s1219 = scalar_lea.vmem [#allocation9], %s1218
        // Predicated region
        $region57: #{tpu_custom_call.1} parent=43 // pred_check
          %p1220 = pneg %p246
        $region58: #{tpu_custom_call.1} parent=43 // pred_check_branch
          %1222 = sbr.rel (%p1220) target = $region60
        $region59: #{tpu_custom_call.1} parent=43 // pred_region
          %s1223 = smul.u32 16, %s33
          %s1225 = ssub.s32 2048, 2048
          %1226 = vsyncadd %s1216, %s1225
          %s1227 = sadd.s32 %s32, %s1223
          %s1228 = smul.addr %s31, 32
          %s1229 = sadd.s32 %s1227, %s1228
          %s1230 = smul.addr %s1229, 128
          %s1231 = scalar_lea.hbm %s6, %s1230
          %s1232 = sshll.u32 %s1219, 4
          %s1233 = int_to_ptr.vmem [resolvable:$true] %s1232
          %1238 = dma.vmem_to_hbm [thread:$0]  %s1233, 2048, %s1231, %s1216, 128, 128, 8
        $region60: #{tpu_custom_call.1} parent=43 // pred_fallthru
          _
      $region44: #{tpu_custom_call.1} parent=5 // pred_fallthru
        _
      %p1239 = scmp.le.s32.totalorder 2, %s21
      // Predicated region
      $region61: #{tpu_custom_call.1} parent=5 // pred_check
        %p1240 = pneg %p1239
      $region62: #{tpu_custom_call.1} parent=5 // pred_check_branch
        %1242 = sbr.rel (%p1240) target = $region64
      $region63: #{tpu_custom_call.1} parent=5 // pred_region
        %s1243 = ssub.s32 %s21, 2
        // Predicated region
        $region65: #{tpu_custom_call.1} parent=63 // pred_check
          %p1244 = pneg %p252
        $region66: #{tpu_custom_call.1} parent=63 // pred_check_branch
          %1246 = sbr.rel (%p1244) target = $region68
        $region67: #{tpu_custom_call.1} parent=63 // pred_region
          %s1247 = sand.u32 %s237, 1
          %s1248 = scalar_lea.sflag [#allocation5], %s1247
          %s1249 = sand.u32 %s237, 1
          %s1250 = smul.addr %s1249, 128
          %s1251 = scalar_lea.vmem [#allocation9], %s1250
          %1252 = dma.done %s1248, 2048
        $region68: #{tpu_custom_call.1} parent=63 // pred_fallthru
          _
      $region64: #{tpu_custom_call.1} parent=5 // pred_fallthru
        _
    $region6: #{tpu_custom_call.1} parent=1 // loop_footer
      %s25 = sadd.s32 1, %s21
    $region7: #{tpu_custom_call.1} parent=1 // loop_footer_branch
      %20 = sbr.rel target = $region3
    $region8: #{tpu_custom_call.1} parent=1 // loop_exit
      _
    %1253 = vsyncpa [#allocation4], 1
    %s1254 = scalar_lea.sflag [#allocation4], 1
    %1255 = vsyncpa %s1254, 1
    %1256 = vsyncpa [#allocation7], 1
    %s1257 = scalar_lea.sflag [#allocation7], 1
    %1258 = vsyncpa %s1257, 1
    %1259 = vsyncpa [#allocation5], 1
    %s1260 = scalar_lea.sflag [#allocation5], 1
    %1261 = vsyncpa %s1260, 1

</llo_original>
